<compile_context>
chip_gen: v6e
topology: v6e:2x2x1
jax: 0.10.0
libtpu: 0.0.40
codegen_flags: <defaults>
</compile_context>

<pallas_src>
import functools

import jax
import jax.numpy as jnp
from jax.experimental import pallas as pl
from jax.experimental.pallas import tpu as pltpu

NUM_HEADS = 20   # FastSelfAttention(20, args.news_dim)
SEG = 128        # lane stride of the segments inside the fused projection

PARAM_ORDER = ("wqkq", "bqkq", "wka", "wt", "m", "w1", "misc")


def fast_user_encoder_kernel(
    x_ref,        # (Bt*S, D) f32   Bt batch elements' history rows, flattened
    wqkq_ref,     # (D, 3*SEG) bf16  [wq | pad | wk | pad | wq@wqa*scale | pad]
    bqkq_ref,     # (1, 3*SEG) f32   matching fused bias row
    wka_ref,      # (D, H) bf16      key_att weight (scale pre-folded)
    wt_ref,       # (D, D) bf16      transform
    m_ref,        # (H, D) bf16      one-hot head->dim expansion
    w1_ref,       # (D, Q) bf16      AdditiveAttention.att_fc1 weight
    misc_ref,     # (5, SEG) f32     rows: [bka*scale, bt, b1, w2, b2]
    o_ref,        # (Bt, D) f32
    *, seq_len):
    S = seq_len
    rows, D = x_ref.shape
    Bt = rows // S
    H = wka_ref.shape[1]
    Q = w1_ref.shape[1]
    bf16 = jnp.bfloat16
    f32 = jnp.float32

    # Small per-matmul bias/weight rows, unpacked from one DMA slab.
    misc = misc_ref[...]
    bka = misc[0:1, 0:H]      # (1, H)
    bt = misc[1:2, 0:D]       # (1, D)
    b1 = misc[2:3, 0:Q]       # (1, Q)
    w2 = misc[3:4, 0:Q]       # (1, Q)
    b2 = misc[4:5, 0:1]       # (1, 1)

    def group_softmax(scores):
        """Softmax over the S positions of each batch element; (Bt*S,H)->(Bt*S,H)."""
        Hs = scores.shape[-1]
        s3 = scores.reshape(Bt, S, Hs)
        s3 = s3 - jnp.max(s3, axis=1, keepdims=True)
        e = jnp.exp(s3)
        inv = pl.reciprocal(jnp.sum(e, axis=1, keepdims=True), approx=False)
        return (e * inv).reshape(rows, Hs)

    def group_sum(a):
        """Per-batch-element sum over S; (Bt*S, D) -> (Bt, 1, D)."""
        return jnp.sum(a.reshape(Bt, S, D), axis=1, keepdims=True)

    x = x_ref[...]                                                       # (Bt*S, D) f32
    x_bf = x.astype(bf16)

    # ---- FastSelfAttention -------------------------------------------------
    # One fused matmul produces q, k, and the query-attention logits sq.
    qkq = (jnp.dot(x_bf, wqkq_ref[...], preferred_element_type=f32)
           + bqkq_ref[...])                                              # (Bt*S, 3*SEG)
    q = qkq[:, 0:D]                                                      # (Bt*S, D)
    k = qkq[:, SEG:SEG + D]                                              # (Bt*S, D)
    sq = qkq[:, 2 * SEG:2 * SEG + H]                                     # (Bt*S, H)

    q3 = q.reshape(Bt, S, D)

    # query attention pooling over the sequence (per head)
    w_q = group_softmax(sq)
    w_q_d = jnp.dot(w_q.astype(bf16), m_ref[...], preferred_element_type=f32)   # (Bt*S, D)
    pooled_q = group_sum(w_q_d * q)                                              # (Bt, 1, D)

    mixed = (k.reshape(Bt, S, D) * pooled_q).reshape(rows, D)                    # (Bt*S, D)

    # key attention pooling over the sequence (per head)
    sk = (jnp.dot(mixed.astype(bf16), wka_ref[...], preferred_element_type=f32)
          + bka)                                                                  # (Bt*S, H)
    w_k = group_softmax(sk)
    w_k_d = jnp.dot(w_k.astype(bf16), m_ref[...], preferred_element_type=f32)    # (Bt*S, D)
    pooled_k = group_sum(w_k_d * mixed)                                           # (Bt, 1, D)

    weighted_value = (pooled_k * q3).reshape(rows, D)                             # (Bt*S, D)
    out = (jnp.dot(weighted_value.astype(bf16), wt_ref[...],
                   preferred_element_type=f32) + bt) + q                          # (Bt*S, D)

    # ---- AdditiveAttention (no mask used by FastUserEncoder.forward) --------
    e = jnp.tanh(jnp.dot(out.astype(bf16), w1_ref[...],
                         preferred_element_type=f32) + b1)                        # (Bt*S, Q)
    e3 = e.reshape(Bt, S, Q)
    # N=1 logit matmul -> VPU multiply + lane reduction (keeps MXU chain short)
    logit = jnp.sum(e3 * w2, axis=-1, keepdims=True) + b2                         # (Bt, S, 1)
    # max-stabilized exp: same result for well-scaled logits, never overflows
    logit = logit - jnp.max(logit, axis=1, keepdims=True)
    alpha = jnp.exp(logit)
    inv = pl.reciprocal(jnp.sum(alpha, axis=1, keepdims=True) + 1e-8, approx=False)
    alpha = alpha * inv                                                            # (Bt, S, 1)
    o_ref[...] = jnp.sum(alpha * out.reshape(Bt, S, D), axis=1)                    # (Bt, D)


def make_params(key, news_dim, query_dim, num_heads=NUM_HEADS):
    """PyTorch-equivalent f32 parameters (nn.Linear-style init), stored as
    (in_features, out_features) so the math is x @ W + b."""
    D, Q = news_dim, query_dim
    H = num_heads

    def lin(k, fan_in, fan_out):
        limit = 1.0 / (fan_in ** 0.5)
        kw, kb = jax.random.split(k)
        w = jax.random.uniform(kw, (fan_in, fan_out), jnp.float32, -limit, limit)
        b = jax.random.uniform(kb, (1, fan_out), jnp.float32, -limit, limit)
        return w, b

    ks = jax.random.split(key, 7)
    p = {}
    p["wq"], p["bq"] = lin(ks[0], D, D)
    p["wk"], p["bk"] = lin(ks[1], D, D)
    p["wqa"], p["bqa"] = lin(ks[2], D, H)
    p["wka"], p["bka"] = lin(ks[3], D, H)
    p["wt"], p["bt"] = lin(ks[4], D, D)
    p["w1"], p["b1"] = lin(ks[5], D, Q)
    p["w2"], p["b2"] = lin(ks[6], Q, 1)
    return p


def prepare_kernel_params(params, num_heads=NUM_HEADS):
    """One-time host-side transform of the PyTorch-style params for the kernel:
      * fold 1/sqrt(head_dim) into query_att / key_att,
      * pre-compose query_att with the query projection (sq comes from x),
      * fuse wq | wk | composed-wqa into one (D, 3*128) bf16 weight with each
        segment starting on a 128-lane boundary (+ matching f32 bias row),
      * pack the remaining small bias / w2 rows into one (5, 128) f32 slab,
      * cast weight matrices to bf16 (all accumulation stays f32),
      * build the one-hot (H, D) head->dim expansion."""
    D = params["wq"].shape[0]
    Q = params["w1"].shape[1]
    H = num_heads
    head_dim = D // H
    scale = jnp.float32(1.0 / (head_dim ** 0.5))
    bf16 = jnp.bfloat16
    f32 = jnp.float32

    # Pre-compose query_att with query: sq = x @ wqa_comp + bqa_comp.
    wqa_s = params["wqa"] * scale                       # (D, H)
    bqa_s = params["bqa"] * scale                       # (1, H)
    wqa_comp = params["wq"] @ wqa_s                     # (D, H)
    bqa_comp = params["bq"] @ wqa_s + bqa_s             # (1, H)

    # Fused [wq | wk | wqa_comp] weight, each at a 128-lane boundary.
    wqkq = jnp.zeros((D, 3 * SEG), f32)
    wqkq = wqkq.at[:, 0:D].set(params["wq"])
    wqkq = wqkq.at[:, SEG:SEG + D].set(params["wk"])
    wqkq = wqkq.at[:, 2 * SEG:2 * SEG + H].set(wqa_comp)
    bqkq = jnp.zeros((1, 3 * SEG), f32)
    bqkq = bqkq.at[:, 0:D].set(params["bq"])
    bqkq = bqkq.at[:, SEG:SEG + D].set(params["bk"])
    bqkq = bqkq.at[:, 2 * SEG:2 * SEG + H].set(bqa_comp)

    # Small rows packed into one slab (one DMA instead of five).
    misc = jnp.zeros((5, SEG), f32)
    misc = misc.at[0, 0:H].set((params["bka"] * scale).reshape(H))
    misc = misc.at[1, 0:D].set(params["bt"].reshape(D))
    misc = misc.at[2, 0:Q].set(params["b1"].reshape(Q))
    misc = misc.at[3, 0:Q].set(params["w2"].reshape(Q))
    misc = misc.at[4, 0:1].set(params["b2"].reshape(1))

    m = (jnp.arange(D)[None, :] // head_dim == jnp.arange(H)[:, None])

    return {
        "wqkq": wqkq.astype(bf16),
        "bqkq": bqkq,                                   # f32
        "wka": (params["wka"] * scale).astype(bf16),
        "wt": params["wt"].astype(bf16),
        "m": m.astype(bf16),
        "w1": params["w1"].astype(bf16),
        "misc": misc,                                   # f32
    }


def fast_user_encoder(log_vec, log_mask, kernel_params, *, batch_tile=None):
    """log_vec: (B, S, D) f32 -> (B, D) f32."""
    # TODO(synk): log_mask is accepted but ignored, exactly like the reference
    # PyTorch forward (neither submodule receives a mask), so padded history
    # positions participate in the softmaxes.
    del log_mask
    B, S, D = log_vec.shape
    H = kernel_params["wka"].shape[1]
    Q = kernel_params["w1"].shape[1]

    if batch_tile is None:
        # This kernel is latency / fixed-overhead bound at small sizes: prefer a
        # single grid step (one big MXU slab) unless the batch is large, then
        # tile so each step has >= 256 MXU rows (and <= ~2048 to bound vreg
        # pressure) with (8,128)-compatible blocks.
        if B * S <= 2048:
            batch_tile = B
        else:
            divisors = [d for d in range(1, B + 1)
                        if B % d == 0 and (d == B or d % 8 == 0)]
            good = [d for d in divisors if 256 <= d * S <= 2048]
            batch_tile = max(good) if good else B
    assert B % batch_tile == 0, (B, batch_tile)
    assert batch_tile == B or batch_tile % 8 == 0, batch_tile
    grid = (B // batch_tile,)
    rows = batch_tile * S

    x2d = log_vec.reshape(B * S, D)   # free, contiguous wrapper-side reshape

    # NOTE: the parameter blocks are grid-invariant (constant index map), so
    # Pallas does not re-DMA them per step; total footprint is a few tens of KB,
    # far below any chip's VMEM, so no vmem_limit / Buffered tuning is needed.
    in_specs = [pl.BlockSpec((rows, D), lambda b: (b, 0))]
    in_specs += [pl.BlockSpec(kernel_params[name].shape, lambda b: (0, 0))
                 for name in PARAM_ORDER]

    # Advisory cost hint so XLA schedules the custom call tightly.
    rows_total = B * S
    flops = 2 * rows_total * D * (3 * SEG + H + D + Q) + 4 * rows_total * H * D
    transcendentals = rows_total * (2 * H + Q + 1)
    param_bytes = sum(int(v.size) * jnp.dtype(v.dtype).itemsize
                      for v in kernel_params.values())
    bytes_accessed = int(log_vec.size) * 4 + param_bytes + B * D * 4
    cost = pl.CostEstimate(flops=int(flops),
                           transcendentals=int(transcendentals),
                           bytes_accessed=int(bytes_accessed))

    kernel = functools.partial(fast_user_encoder_kernel, seq_len=S)
    out = pl.pallas_call(
        kernel,
        out_shape=jax.ShapeDtypeStruct((B, D), jnp.float32),
        grid=grid,
        in_specs=in_specs,
        out_specs=pl.BlockSpec((batch_tile, D), lambda b: (b, 0)),
        compiler_params=pltpu.CompilerParams(
            dimension_semantics=(("parallel",) if grid[0] > 1
                                 else ("arbitrary",))),
        cost_estimate=cost,
    )(x2d, *[kernel_params[name] for name in PARAM_ORDER])
    return out


def ref_forward(log_vec, params, num_heads=NUM_HEADS):
    """Pure-JAX f32 reference mirroring the PyTorch Fastformer + AdditiveAttention."""
    p = params
    D = log_vec.shape[-1]
    head_dim = D // num_heads
    scale = 1.0 / (head_dim ** 0.5)
    m = (jnp.arange(D)[None, :] // head_dim
         == jnp.arange(num_heads)[:, None]).astype(jnp.float32)
    q = log_vec @ p["wq"] + p["bq"]
    k = log_vec @ p["wk"] + p["bk"]
    sq = (q @ p["wqa"] + p["bqa"]) * scale
    w_q = jax.nn.softmax(sq, axis=1)
    pooled_q = jnp.sum((w_q @ m) * q, axis=1, keepdims=True)
    mixed = k * pooled_q
    sk = (mixed @ p["wka"] + p["bka"]) * scale
    w_k = jax.nn.softmax(sk, axis=1)
    pooled_k = jnp.sum((w_k @ m) * mixed, axis=1, keepdims=True)
    out = (pooled_k * q) @ p["wt"] + p["bt"] + q
    e = jnp.tanh(out @ p["w1"] + p["b1"])
    alpha = jnp.exp(e @ p["w2"] + p["b2"])
    alpha = alpha / (jnp.sum(alpha, axis=1, keepdims=True) + 1e-8)
    return jnp.sum(alpha * out, axis=1)


if __name__ == "__main__":
    B, S = 16, 8                # batch, history length
    NEWS_DIM = 40               # divisible by NUM_HEADS=20 -> head_dim=2
    QUERY_DIM = 32              # args.user_query_vector_dim

    key = jax.random.PRNGKey(0)
    k_x, k_p = jax.random.split(key)
    log_vec = jax.random.normal(k_x, (B, S, NEWS_DIM), dtype=jnp.float32)
    log_mask = jnp.ones((B, S), dtype=jnp.float32)   # unused by forward (parity only)

    params = make_params(k_p, NEWS_DIM, QUERY_DIM)
    kparams = prepare_kernel_params(params)          # one-time host-side transform

    # Default batch_tile -> B*S = 128 rows in a single grid step.
    out = fast_user_encoder(log_vec, log_mask, kparams)
    out = jax.block_until_ready(out)

    ref = ref_forward(log_vec, params)
    assert out.shape == (B, NEWS_DIM), out.shape
    max_err = float(jnp.max(jnp.abs(out - ref)))
    assert jnp.allclose(out, ref, atol=5e-2, rtol=5e-2), (
        f"mismatch vs reference (max abs err {max_err})")
    print("KERNEL_OK")
</pallas_src>

<mosaic_0001>
module attributes {stable_mosaic.version = 11 : i64} {
  func.func @fast_user_encoder_kernel(%arg0: i32, %arg1: memref<128x40xf32, #tpu.memory_space<vmem>>, %arg2: memref<40x384xbf16, #tpu.memory_space<vmem>>, %arg3: memref<1x384xf32, #tpu.memory_space<vmem>>, %arg4: memref<40x20xbf16, #tpu.memory_space<vmem>>, %arg5: memref<40x40xbf16, #tpu.memory_space<vmem>>, %arg6: memref<20x40xbf16, #tpu.memory_space<vmem>>, %arg7: memref<40x32xbf16, #tpu.memory_space<vmem>>, %arg8: memref<5x128xf32, #tpu.memory_space<vmem>>, %arg9: memref<16x40xf32, #tpu.memory_space<vmem>>) attributes {dimension_semantics = [#tpu.dimension_semantics<arbitrary>], iteration_bounds = array<i64: 1>, scalar_prefetch = 0 : i64, scratch_operands = 0 : i64, tpu.core_type = #tpu.core_type<tc>, window_params = [{transform_indices = @transform_0, window_bounds = array<i64: 128, 40>}, {pipeline_mode = #tpu.pipeline_mode<synchronous>, transform_indices = @transform_1, window_bounds = array<i64: 40, 384>}, {pipeline_mode = #tpu.pipeline_mode<synchronous>, transform_indices = @transform_2, window_bounds = array<i64: 1, 384>}, {pipeline_mode = #tpu.pipeline_mode<synchronous>, transform_indices = @transform_3, window_bounds = array<i64: 40, 20>}, {pipeline_mode = #tpu.pipeline_mode<synchronous>, transform_indices = @transform_4, window_bounds = array<i64: 40, 40>}, {pipeline_mode = #tpu.pipeline_mode<synchronous>, transform_indices = @transform_5, window_bounds = array<i64: 20, 40>}, {pipeline_mode = #tpu.pipeline_mode<synchronous>, transform_indices = @transform_6, window_bounds = array<i64: 40, 32>}, {pipeline_mode = #tpu.pipeline_mode<synchronous>, transform_indices = @transform_7, window_bounds = array<i64: 5, 128>}, {transform_indices = @transform_8, window_bounds = array<i64: 16, 40>}]} {
    %c0 = arith.constant 0 : index
    %c0_0 = arith.constant 0 : index
    %0 = vector.load %arg8[%c0, %c0_0] : memref<5x128xf32, #tpu.memory_space<vmem>>, vector<5x128xf32>
    %1 = vector.extract_strided_slice %0 {offsets = [0, 0], sizes = [1, 20], strides = [1, 1]} : vector<5x128xf32> to vector<1x20xf32>
    %2 = vector.extract_strided_slice %0 {offsets = [1, 0], sizes = [1, 40], strides = [1, 1]} : vector<5x128xf32> to vector<1x40xf32>
    %3 = vector.extract_strided_slice %0 {offsets = [2, 0], sizes = [1, 32], strides = [1, 1]} : vector<5x128xf32> to vector<1x32xf32>
    %4 = vector.extract_strided_slice %0 {offsets = [3, 0], sizes = [1, 32], strides = [1, 1]} : vector<5x128xf32> to vector<1x32xf32>
    %5 = vector.extract_strided_slice %0 {offsets = [4, 0], sizes = [1, 1], strides = [1, 1]} : vector<5x128xf32> to vector<1x1xf32>
    %c0_1 = arith.constant 0 : index
    %c0_2 = arith.constant 0 : index
    %6 = vector.load %arg1[%c0_1, %c0_2] : memref<128x40xf32, #tpu.memory_space<vmem>>, vector<128x40xf32>
    %7 = arith.truncf %6 : vector<128x40xf32> to vector<128x40xbf16>
    %c0_3 = arith.constant 0 : index
    %c0_4 = arith.constant 0 : index
    %8 = vector.load %arg2[%c0_3, %c0_4] : memref<40x384xbf16, #tpu.memory_space<vmem>>, vector<40x384xbf16>
    %cst = arith.constant dense<0.000000e+00> : vector<128x384xf32>
    %9 = tpu.matmul %7, %8, %cst {dimension_numbers = #tpu.dot_dimension_numbers<[1], [0], [0], [1], [0, 0, 1, 1], [], []>} : vector<128x40xbf16>, vector<40x384xbf16>, vector<128x384xf32> -> vector<128x384xf32>
    %c0_5 = arith.constant 0 : index
    %c0_6 = arith.constant 0 : index
    %10 = vector.load %arg3[%c0_5, %c0_6] : memref<1x384xf32, #tpu.memory_space<vmem>>, vector<1x384xf32>
    %11 = vector.broadcast %10 : vector<1x384xf32> to vector<128x384xf32>
    %12 = arith.addf %9, %11 : vector<128x384xf32>
    %13 = vector.extract_strided_slice %12 {offsets = [0, 0], sizes = [128, 40], strides = [1, 1]} : vector<128x384xf32> to vector<128x40xf32>
    %14 = vector.extract_strided_slice %12 {offsets = [0, 128], sizes = [128, 40], strides = [1, 1]} : vector<128x384xf32> to vector<128x40xf32>
    %15 = vector.extract_strided_slice %12 {offsets = [0, 256], sizes = [128, 20], strides = [1, 1]} : vector<128x384xf32> to vector<128x20xf32>
    %16 = vector.shape_cast %13 : vector<128x40xf32> to vector<16x8x40xf32>
    %17 = vector.shape_cast %15 : vector<128x20xf32> to vector<16x8x20xf32>
    %cst_7 = arith.constant dense<0xFF800000> : vector<16x20xf32>
    %18 = vector.multi_reduction <maximumf>, %17, %cst_7 [1] : vector<16x8x20xf32> to vector<16x20xf32>
    %19 = vector.shape_cast %18 : vector<16x20xf32> to vector<16x1x20xf32>
    %20 = vector.broadcast %19 : vector<16x1x20xf32> to vector<16x8x20xf32>
    %21 = arith.subf %17, %20 : vector<16x8x20xf32>
    %22 = math.exp %21 : vector<16x8x20xf32>
    %cst_8 = arith.constant dense<0.000000e+00> : vector<16x20xf32>
    %23 = vector.multi_reduction <add>, %22, %cst_8 [1] : vector<16x8x20xf32> to vector<16x20xf32>
    %24 = vector.shape_cast %23 : vector<16x20xf32> to vector<16x1x20xf32>
    %25 = tpu.reciprocal %24 : vector<16x1x20xf32> -> vector<16x1x20xf32>
    %26 = vector.broadcast %25 : vector<16x1x20xf32> to vector<16x8x20xf32>
    %27 = arith.mulf %22, %26 : vector<16x8x20xf32>
    %28 = vector.shape_cast %27 : vector<16x8x20xf32> to vector<128x20xf32>
    %29 = arith.truncf %28 : vector<128x20xf32> to vector<128x20xbf16>
    %c0_9 = arith.constant 0 : index
    %c0_10 = arith.constant 0 : index
    %30 = vector.load %arg6[%c0_9, %c0_10] : memref<20x40xbf16, #tpu.memory_space<vmem>>, vector<20x40xbf16>
    %cst_11 = arith.constant dense<0.000000e+00> : vector<128x40xf32>
    %31 = tpu.matmul %29, %30, %cst_11 {dimension_numbers = #tpu.dot_dimension_numbers<[1], [0], [0], [1], [0, 0, 1, 1], [], []>} : vector<128x20xbf16>, vector<20x40xbf16>, vector<128x40xf32> -> vector<128x40xf32>
    %32 = arith.mulf %31, %13 : vector<128x40xf32>
    %33 = vector.shape_cast %32 : vector<128x40xf32> to vector<16x8x40xf32>
    %cst_12 = arith.constant dense<0.000000e+00> : vector<16x40xf32>
    %34 = vector.multi_reduction <add>, %33, %cst_12 [1] : vector<16x8x40xf32> to vector<16x40xf32>
    %35 = vector.shape_cast %34 : vector<16x40xf32> to vector<16x1x40xf32>
    %36 = vector.shape_cast %14 : vector<128x40xf32> to vector<16x8x40xf32>
    %37 = vector.broadcast %35 : vector<16x1x40xf32> to vector<16x8x40xf32>
    %38 = arith.mulf %36, %37 : vector<16x8x40xf32>
    %39 = vector.shape_cast %38 : vector<16x8x40xf32> to vector<128x40xf32>
    %40 = arith.truncf %39 : vector<128x40xf32> to vector<128x40xbf16>
    %c0_13 = arith.constant 0 : index
    %c0_14 = arith.constant 0 : index
    %41 = vector.load %arg4[%c0_13, %c0_14] : memref<40x20xbf16, #tpu.memory_space<vmem>>, vector<40x20xbf16>
    %cst_15 = arith.constant dense<0.000000e+00> : vector<128x20xf32>
    %42 = tpu.matmul %40, %41, %cst_15 {dimension_numbers = #tpu.dot_dimension_numbers<[1], [0], [0], [1], [0, 0, 1, 1], [], []>} : vector<128x40xbf16>, vector<40x20xbf16>, vector<128x20xf32> -> vector<128x20xf32>
    %43 = vector.broadcast %1 : vector<1x20xf32> to vector<128x20xf32>
    %44 = arith.addf %42, %43 : vector<128x20xf32>
    %45 = vector.shape_cast %44 : vector<128x20xf32> to vector<16x8x20xf32>
    %cst_16 = arith.constant dense<0xFF800000> : vector<16x20xf32>
    %46 = vector.multi_reduction <maximumf>, %45, %cst_16 [1] : vector<16x8x20xf32> to vector<16x20xf32>
    %47 = vector.shape_cast %46 : vector<16x20xf32> to vector<16x1x20xf32>
    %48 = vector.broadcast %47 : vector<16x1x20xf32> to vector<16x8x20xf32>
    %49 = arith.subf %45, %48 : vector<16x8x20xf32>
    %50 = math.exp %49 : vector<16x8x20xf32>
    %cst_17 = arith.constant dense<0.000000e+00> : vector<16x20xf32>
    %51 = vector.multi_reduction <add>, %50, %cst_17 [1] : vector<16x8x20xf32> to vector<16x20xf32>
    %52 = vector.shape_cast %51 : vector<16x20xf32> to vector<16x1x20xf32>
    %53 = tpu.reciprocal %52 : vector<16x1x20xf32> -> vector<16x1x20xf32>
    %54 = vector.broadcast %53 : vector<16x1x20xf32> to vector<16x8x20xf32>
    %55 = arith.mulf %50, %54 : vector<16x8x20xf32>
    %56 = vector.shape_cast %55 : vector<16x8x20xf32> to vector<128x20xf32>
    %57 = arith.truncf %56 : vector<128x20xf32> to vector<128x20xbf16>
    %c0_18 = arith.constant 0 : index
    %c0_19 = arith.constant 0 : index
    %58 = vector.load %arg6[%c0_18, %c0_19] : memref<20x40xbf16, #tpu.memory_space<vmem>>, vector<20x40xbf16>
    %cst_20 = arith.constant dense<0.000000e+00> : vector<128x40xf32>
    %59 = tpu.matmul %57, %58, %cst_20 {dimension_numbers = #tpu.dot_dimension_numbers<[1], [0], [0], [1], [0, 0, 1, 1], [], []>} : vector<128x20xbf16>, vector<20x40xbf16>, vector<128x40xf32> -> vector<128x40xf32>
    %60 = arith.mulf %59, %39 : vector<128x40xf32>
    %61 = vector.shape_cast %60 : vector<128x40xf32> to vector<16x8x40xf32>
    %cst_21 = arith.constant dense<0.000000e+00> : vector<16x40xf32>
    %62 = vector.multi_reduction <add>, %61, %cst_21 [1] : vector<16x8x40xf32> to vector<16x40xf32>
    %63 = vector.shape_cast %62 : vector<16x40xf32> to vector<16x1x40xf32>
    %64 = vector.broadcast %63 : vector<16x1x40xf32> to vector<16x8x40xf32>
    %65 = arith.mulf %64, %16 : vector<16x8x40xf32>
    %66 = vector.shape_cast %65 : vector<16x8x40xf32> to vector<128x40xf32>
    %67 = arith.truncf %66 : vector<128x40xf32> to vector<128x40xbf16>
    %c0_22 = arith.constant 0 : index
    %c0_23 = arith.constant 0 : index
    %68 = vector.load %arg5[%c0_22, %c0_23] : memref<40x40xbf16, #tpu.memory_space<vmem>>, vector<40x40xbf16>
    %cst_24 = arith.constant dense<0.000000e+00> : vector<128x40xf32>
    %69 = tpu.matmul %67, %68, %cst_24 {dimension_numbers = #tpu.dot_dimension_numbers<[1], [0], [0], [1], [0, 0, 1, 1], [], []>} : vector<128x40xbf16>, vector<40x40xbf16>, vector<128x40xf32> -> vector<128x40xf32>
    %70 = vector.broadcast %2 : vector<1x40xf32> to vector<128x40xf32>
    %71 = arith.addf %69, %70 : vector<128x40xf32>
    %72 = arith.addf %71, %13 : vector<128x40xf32>
    %73 = arith.truncf %72 : vector<128x40xf32> to vector<128x40xbf16>
    %c0_25 = arith.constant 0 : index
    %c0_26 = arith.constant 0 : index
    %74 = vector.load %arg7[%c0_25, %c0_26] : memref<40x32xbf16, #tpu.memory_space<vmem>>, vector<40x32xbf16>
    %cst_27 = arith.constant dense<0.000000e+00> : vector<128x32xf32>
    %75 = tpu.matmul %73, %74, %cst_27 {dimension_numbers = #tpu.dot_dimension_numbers<[1], [0], [0], [1], [0, 0, 1, 1], [], []>} : vector<128x40xbf16>, vector<40x32xbf16>, vector<128x32xf32> -> vector<128x32xf32>
    %76 = vector.broadcast %3 : vector<1x32xf32> to vector<128x32xf32>
    %77 = arith.addf %75, %76 : vector<128x32xf32>
    %78 = math.tanh %77 : vector<128x32xf32>
    %79 = vector.shape_cast %78 : vector<128x32xf32> to vector<16x8x32xf32>
    %80 = vector.shape_cast %4 : vector<1x32xf32> to vector<1x1x32xf32>
    %81 = vector.broadcast %80 : vector<1x1x32xf32> to vector<16x8x32xf32>
    %82 = arith.mulf %79, %81 : vector<16x8x32xf32>
    %cst_28 = arith.constant dense<0.000000e+00> : vector<16x8xf32>
    %83 = vector.multi_reduction <add>, %82, %cst_28 [2] : vector<16x8x32xf32> to vector<16x8xf32>
    %84 = vector.shape_cast %83 : vector<16x8xf32> to vector<16x8x1xf32>
    %85 = vector.shape_cast %5 : vector<1x1xf32> to vector<1x1x1xf32>
    %86 = vector.broadcast %85 : vector<1x1x1xf32> to vector<16x8x1xf32>
    %87 = arith.addf %84, %86 : vector<16x8x1xf32>
    %cst_29 = arith.constant dense<0xFF800000> : vector<16x1xf32>
    %88 = vector.multi_reduction <maximumf>, %87, %cst_29 [1] : vector<16x8x1xf32> to vector<16x1xf32>
    %89 = vector.shape_cast %88 : vector<16x1xf32> to vector<16x1x1xf32>
    %90 = vector.broadcast %89 : vector<16x1x1xf32> to vector<16x8x1xf32>
    %91 = arith.subf %87, %90 : vector<16x8x1xf32>
    %92 = math.exp %91 : vector<16x8x1xf32>
    %cst_30 = arith.constant dense<0.000000e+00> : vector<16x1xf32>
    %93 = vector.multi_reduction <add>, %92, %cst_30 [1] : vector<16x8x1xf32> to vector<16x1xf32>
    %94 = vector.shape_cast %93 : vector<16x1xf32> to vector<16x1x1xf32>
    %cst_31 = arith.constant 9.99999993E-9 : f32
    %95 = vector.broadcast %cst_31 : f32 to vector<16x1x1xf32>
    %96 = arith.addf %94, %95 : vector<16x1x1xf32>
    %97 = tpu.reciprocal %96 : vector<16x1x1xf32> -> vector<16x1x1xf32>
    %98 = vector.broadcast %97 : vector<16x1x1xf32> to vector<16x8x1xf32>
    %99 = arith.mulf %92, %98 : vector<16x8x1xf32>
    %100 = vector.shape_cast %72 : vector<128x40xf32> to vector<16x8x40xf32>
    %101 = vector.broadcast %99 : vector<16x8x1xf32> to vector<16x8x40xf32>
    %102 = arith.mulf %101, %100 : vector<16x8x40xf32>
    %cst_32 = arith.constant dense<0.000000e+00> : vector<16x40xf32>
    %103 = vector.multi_reduction <add>, %102, %cst_32 [1] : vector<16x8x40xf32> to vector<16x40xf32>
    %c0_33 = arith.constant 0 : index
    %c0_34 = arith.constant 0 : index
    %104 = vector.load %arg9[%c0_33, %c0_34] : memref<16x40xf32, #tpu.memory_space<vmem>>, vector<16x40xf32>
    tpu.vector_store %arg9[%c0_33, %c0_34], %103 {strides = array<i32>} : memref<16x40xf32, #tpu.memory_space<vmem>>, vector<16x40xf32>,
    return
  }
  func.func @transform_0(%arg0: i32) -> (i32, i32) {
    %c0_i32 = arith.constant 0 : i32
    %c0_i32_0 = arith.constant 0 : i32
    return %arg0, %c0_i32 : i32, i32
  }
  func.func @transform_1(%arg0: i32) -> (i32, i32) {
    %c0_i32 = arith.constant 0 : i32
    %c0_i32_0 = arith.constant 0 : i32
    %c0_i32_1 = arith.constant 0 : i32
    return %c0_i32, %c0_i32_0 : i32, i32
  }
  func.func @transform_2(%arg0: i32) -> (i32, i32) {
    %c0_i32 = arith.constant 0 : i32
    %c0_i32_0 = arith.constant 0 : i32
    %c0_i32_1 = arith.constant 0 : i32
    return %c0_i32, %c0_i32_0 : i32, i32
  }
  func.func @transform_3(%arg0: i32) -> (i32, i32) {
    %c0_i32 = arith.constant 0 : i32
    %c0_i32_0 = arith.constant 0 : i32
    %c0_i32_1 = arith.constant 0 : i32
    return %c0_i32, %c0_i32_0 : i32, i32
  }
  func.func @transform_4(%arg0: i32) -> (i32, i32) {
    %c0_i32 = arith.constant 0 : i32
    %c0_i32_0 = arith.constant 0 : i32
    %c0_i32_1 = arith.constant 0 : i32
    return %c0_i32, %c0_i32_0 : i32, i32
  }
  func.func @transform_5(%arg0: i32) -> (i32, i32) {
    %c0_i32 = arith.constant 0 : i32
    %c0_i32_0 = arith.constant 0 : i32
    %c0_i32_1 = arith.constant 0 : i32
    return %c0_i32, %c0_i32_0 : i32, i32
  }
  func.func @transform_6(%arg0: i32) -> (i32, i32) {
    %c0_i32 = arith.constant 0 : i32
    %c0_i32_0 = arith.constant 0 : i32
    %c0_i32_1 = arith.constant 0 : i32
    return %c0_i32, %c0_i32_0 : i32, i32
  }
  func.func @transform_7(%arg0: i32) -> (i32, i32) {
    %c0_i32 = arith.constant 0 : i32
    %c0_i32_0 = arith.constant 0 : i32
    %c0_i32_1 = arith.constant 0 : i32
    return %c0_i32, %c0_i32_0 : i32, i32
  }
  func.func @transform_8(%arg0: i32) -> (i32, i32) {
    %c0_i32 = arith.constant 0 : i32
    %c0_i32_0 = arith.constant 0 : i32
    return %arg0, %c0_i32 : i32, i32
  }
}

</mosaic_0001>

<llo_original>
// kernel: tpu_custom_call.1
$region0: #{tpu_custom_call.1}
  #allocation0 [shape = 'u32[]', space=smem, size = 0x4, offset = 0x4, fixed_abs, tag = 'smem constant byte address 0x4 - core index']
  #allocation1 [shape = 'u32[144,128]{1,0:T(1,128)}', space=vmem, size = 0x12000, scoped, tag = 'internal scratch']
  %s0 = inlined_call_operand.vmem [shape: f32[128,40], index: 0, kind: input, shape index: {}]
  %s1 = inlined_call_operand.vmem [shape: bf16[40,384], index: 1, kind: input, shape index: {}]
  %s2 = inlined_call_operand.vmem [shape: f32[1,384], index: 2, kind: input, shape index: {}]
  %s3 = inlined_call_operand.vmem [shape: bf16[40,20], index: 3, kind: input, shape index: {}]
  %s4 = inlined_call_operand.vmem [shape: bf16[40,40], index: 4, kind: input, shape index: {}]
  %s5 = inlined_call_operand.vmem [shape: bf16[20,40], index: 5, kind: input, shape index: {}]
  %s6 = inlined_call_operand.vmem [shape: bf16[40,32], index: 6, kind: input, shape index: {}]
  %s7 = inlined_call_operand.vmem [shape: f32[5,128], index: 7, kind: input, shape index: {}]
  %s8 = inlined_call_operand.hbm [shape: f32[16,40], index: 8, kind: output, shape index: {}]
  %s9 = sld [smem:[#allocation0]]
  $region42: #{tpu_custom_call.1} parent=0
    _
  %s11 = ssub.s32 1, %s9
  %s12 = scalar_select 0, %s11, %s9
  $region1: #{tpu_custom_call.1} parent=0
    #allocation2 [shape = 'u8[8192]{0}', space=vmem, size = 0x2000, scoped, tag = 'output window, operand 0, single buffered']
    #allocation3 [shape = 's32[1]{0}', space=sflag, size = 0x4, scoped, tag = 'scoped memory for tpu_custom_call.1']
    %13 = vsyncpa [#allocation3], 0
    // Predicated region
    $region2: #{tpu_custom_call.1} parent=1 // pred_check
      _
    $region3: #{tpu_custom_call.1} parent=1 // pred_check_branch
      %15 = sbr.rel (0) target = $region5
    $region4: #{tpu_custom_call.1} parent=1 // pred_region
      _
    $region5: #{tpu_custom_call.1} parent=1 // pred_fallthru
      _
    // Predicated region
    $region6: #{tpu_custom_call.1} parent=1 // pred_check
      _
    $region7: #{tpu_custom_call.1} parent=1 // pred_check_branch
      %17 = sbr.rel (0) target = $region9
    $region8: #{tpu_custom_call.1} parent=1 // pred_region
      _
    $region9: #{tpu_custom_call.1} parent=1 // pred_fallthru
      _
    // Predicated region
    $region10: #{tpu_custom_call.1} parent=1 // pred_check
      _
    $region11: #{tpu_custom_call.1} parent=1 // pred_check_branch
      %19 = sbr.rel (0) target = $region13
    $region12: #{tpu_custom_call.1} parent=1 // pred_region
      _
    $region13: #{tpu_custom_call.1} parent=1 // pred_fallthru
      _
    // Predicated region
    $region14: #{tpu_custom_call.1} parent=1 // pred_check
      _
    $region15: #{tpu_custom_call.1} parent=1 // pred_check_branch
      %21 = sbr.rel (0) target = $region17
    $region16: #{tpu_custom_call.1} parent=1 // pred_region
      _
    $region17: #{tpu_custom_call.1} parent=1 // pred_fallthru
      _
    // Predicated region
    $region18: #{tpu_custom_call.1} parent=1 // pred_check
      _
    $region19: #{tpu_custom_call.1} parent=1 // pred_check_branch
      %23 = sbr.rel (0) target = $region21
    $region20: #{tpu_custom_call.1} parent=1 // pred_region
      _
    $region21: #{tpu_custom_call.1} parent=1 // pred_fallthru
      _
    // Predicated region
    $region22: #{tpu_custom_call.1} parent=1 // pred_check
      _
    $region23: #{tpu_custom_call.1} parent=1 // pred_check_branch
      %25 = sbr.rel (0) target = $region25
    $region24: #{tpu_custom_call.1} parent=1 // pred_region
      _
    $region25: #{tpu_custom_call.1} parent=1 // pred_fallthru
      _
    // Predicated region
    $region26: #{tpu_custom_call.1} parent=1 // pred_check
      _
    $region27: #{tpu_custom_call.1} parent=1 // pred_check_branch
      %27 = sbr.rel (0) target = $region29
    $region28: #{tpu_custom_call.1} parent=1 // pred_region
      _
    $region29: #{tpu_custom_call.1} parent=1 // pred_fallthru
      _
    // Predicated region
    $region30: #{tpu_custom_call.1} parent=1 // pred_check
      _
    $region31: #{tpu_custom_call.1} parent=1 // pred_check_branch
      %29 = sbr.rel (0) target = $region33
    $region32: #{tpu_custom_call.1} parent=1 // pred_region
      _
    $region33: #{tpu_custom_call.1} parent=1 // pred_fallthru
      _
    %v31 = vld [vmem:[%s7] sm:$0x1f]
    %v32 = vld [vmem:[%s0] sm:$0xff]
    %v33 = vld [vmem:[%s0 + $0x8] sm:$0xff]
    %v34 = vld [vmem:[%s0 + $0x10] sm:$0xff]
    %v35 = vld [vmem:[%s0 + $0x18] sm:$0xff]
    %v36 = vld [vmem:[%s0 + $0x20] sm:$0xff]
    %v37 = vld [vmem:[%s0 + $0x28] sm:$0xff]
    %v38 = vld [vmem:[%s0 + $0x30] sm:$0xff]
    %v39 = vld [vmem:[%s0 + $0x38] sm:$0xff]
    %v40 = vld [vmem:[%s0 + $0x40] sm:$0xff]
    %v41 = vld [vmem:[%s0 + $0x48] sm:$0xff]
    %v42 = vld [vmem:[%s0 + $0x50] sm:$0xff]
    %v43 = vld [vmem:[%s0 + $0x58] sm:$0xff]
    %v44 = vld [vmem:[%s0 + $0x60] sm:$0xff]
    %v45 = vld [vmem:[%s0 + $0x68] sm:$0xff]
    %v46 = vld [vmem:[%s0 + $0x70] sm:$0xff]
    %v47 = vld [vmem:[%s0 + $0x78] sm:$0xff]
    %v48 = vpack.c.bf16 %v33, %v32
    %v49 = vpack.c.bf16 %v35, %v34
    %v50 = vpack.c.bf16 %v37, %v36
    %v51 = vpack.c.bf16 %v39, %v38
    %v52 = vpack.c.bf16 %v41, %v40
    %v53 = vpack.c.bf16 %v43, %v42
    %v54 = vpack.c.bf16 %v45, %v44
    %v55 = vpack.c.bf16 %v47, %v46
    %v56 = vld [vmem:[%s1] sm:$0xff]
    %v57 = vld [vmem:[%s1 + $0x8] sm:$0xf]
    %v58 = vld [vmem:[%s1 + $0xc] sm:$0xff]
    %v59 = vld [vmem:[%s1 + $0x14] sm:$0xf]
    %v60 = vld [vmem:[%s1 + $0x18] sm:$0xff]
    %v61 = vld [vmem:[%s1 + $0x20] sm:$0xf]
    %v62 = vld [vmem:[%s1 + $0x24] sm:$0xff]
    %v63 = vld [vmem:[%s1 + $0x2c] sm:$0xf]
    %v64 = vld [vmem:[%s1 + $0x30] sm:$0xff]
    %v65 = vld [vmem:[%s1 + $0x38] sm:$0xf]
    %v66 = vld [vmem:[%s2] sm:$0x7]
    %v68 = vlaneseq
    %v69 = vshrl.u32 %v68, 7
    %v70 = vsub.s32 0, %v69
    %v71 = vrot.slane %v66, %v70
    %v72 = vlaneseq
    %v73 = vshrl.u32 %v72, 7
    %v74 = vsub.s32 1, %v73
    %v75 = vrot.slane %v66, %v74
    %v76 = vlaneseq
    %v77 = vshrl.u32 %v76, 7
    %v78 = vsub.s32 2, %v77
    %v79 = vrot.slane %v66, %v78
    %v93 = vunpack.c.l.b16 %v56
    %v94 = vunpack.c.h.b16 %v56
    %v95 = vunpack.c.l.b16 %v57
    %v96 = vunpack.c.l.b16 %v58
    %v97 = vunpack.c.h.b16 %v58
    %v98 = vunpack.c.l.b16 %v59
    %v99 = vunpack.c.l.b16 %v60
    %v100 = vunpack.c.h.b16 %v60
    %v101 = vunpack.c.l.b16 %v61
    %v102 = vunpack.c.l.b16 %v62
    %v103 = vunpack.c.h.b16 %v62
    %v104 = vunpack.c.l.b16 %v63
    %v105 = vunpack.c.l.b16 %v64
    %v106 = vunpack.c.h.b16 %v64
    %v107 = vunpack.c.l.b16 %v65
    %v108 = vpack.c.b16 %v96, %v93
    %v109 = vpack.c.b16 %v97, %v94
    %v110 = vpack.c.b16 %v98, %v95
    %v111 = vpack.c.b16 %v102, %v99
    %v112 = vpack.c.b16 %v103, %v100
    %v113 = vpack.c.b16 %v104, %v101
    %v114 = vpack.c.b16 %v105, %v105
    %v115 = vpack.c.b16 %v106, %v106
    %v116 = vpack.c.b16 %v107, %v107
    %vm123 = vcmask 326656
    %v125 = vsel %vm123, %v48, 0
    %v128 = vsel %vm123, %v49, 0
    %v131 = vsel %vm123, %v50, 0
    %v134 = vsel %vm123, %v51, 0
    %v137 = vsel %vm123, %v52, 0
    %v140 = vsel %vm123, %v53, 0
    %v143 = vsel %vm123, %v54, 0
    %v146 = vsel %vm123, %v55, 0
    %vm148 = vcmask 1043456
    %v150 = vsel %vm148, %v114, 0
    %v153 = vsel %vm148, %v115, 0
    %v156 = vsel %vm148, %v116, 0
    %158 = vmatprep.subr.bf16.mxu0 0
    %159 = vmatpush1.bf16.msra.mxu0 0
    %160 = vmatprep.subr.bf16.mxu0 0
    %161 = vmatpush1.bf16.msra.mxu0 0
    %162 = vmatprep.subr.bf16.mxu0 0
    %163 = vmatpush1.bf16.msra.mxu0 0
    %164 = vmatprep.subr.bf16.mxu0 0
    %165 = vmatpush1.bf16.msra.mxu0 0
    %166 = vmatprep.subr.bf16.mxu0 0
    %167 = vmatpush1.bf16.msra.mxu0 0
    %168 = vmatprep.subr.bf16.mxu0 %v153
    %169 = vmatpush1.bf16.msra.mxu0 %v150
    %170 = vmatprep.subr.bf16.mxu0 %v112
    %171 = vmatpush1.bf16.msra.mxu0 %v111
    %172 = vmatprep.subr.bf16.mxu0 %v109
    %173 = vmatpush1.bf16.msra.mxu0 %v108
    %174 = vmatprep.subr.bf16.mxu0 0
    %175 = vmatpush2.bf16.msra.mxu0 0
    %176 = vmatprep.subr.bf16.mxu0 0
    %177 = vmatpush2.bf16.msra.mxu0 0
    %178 = vmatprep.subr.bf16.mxu0 0
    %179 = vmatpush2.bf16.msra.mxu0 0
    %180 = vmatprep.subr.bf16.mxu0 0
    %181 = vmatpush2.bf16.msra.mxu0 0
    %182 = vmatprep.subr.bf16.mxu0 0
    %183 = vmatpush2.bf16.msra.mxu0 0
    %184 = vmatprep.subr.bf16.mxu0 0
    %185 = vmatpush2.bf16.msra.mxu0 0
    %186 = vmatprep.subr.bf16.mxu0 0
    %187 = vmatpush2.bf16.msra.mxu0 0
    %188 = vmatprep.subr.bf16.mxu0 0
    %189 = vmatpush2.bf16.msra.mxu0 0
    %190 = vmatprep.mubr.bf16.mxu0 0
    %191 = vmatmul.mubr.bf16.gmra.mxu0 %v125
    %v192 = vpop.f32.mrf.mxu0
    %v193 = vadd.f32 %v71, %v192
    %v194 = vpop.f32.mrf.mxu0
    %v195 = vadd.f32 %v75, %v194
    %v196 = vpop.f32.mrf.mxu0
    %v197 = vadd.f32 %v71, %v196
    %v198 = vpop.f32.mrf.mxu0
    %v199 = vadd.f32 %v75, %v198
    %200 = vmatprep.mubr.bf16.mxu0 0
    %201 = vmatmul.mubr.bf16.gmra.mxu0 %v128
    %v202 = vpop.f32.mrf.mxu0
    %v203 = vadd.f32 %v71, %v202
    %v204 = vpop.f32.mrf.mxu0
    %v205 = vadd.f32 %v75, %v204
    %v206 = vpop.f32.mrf.mxu0
    %v207 = vadd.f32 %v71, %v206
    %v208 = vpop.f32.mrf.mxu0
    %v209 = vadd.f32 %v75, %v208
    %210 = vmatprep.mubr.bf16.mxu0 0
    %211 = vmatmul.mubr.bf16.gmra.mxu0 %v131
    %v212 = vpop.f32.mrf.mxu0
    %v213 = vadd.f32 %v71, %v212
    %v214 = vpop.f32.mrf.mxu0
    %v215 = vadd.f32 %v75, %v214
    %v216 = vpop.f32.mrf.mxu0
    %v217 = vadd.f32 %v71, %v216
    %v218 = vpop.f32.mrf.mxu0
    %v219 = vadd.f32 %v75, %v218
    %220 = vmatprep.mubr.bf16.mxu0 0
    %221 = vmatmul.mubr.bf16.gmra.mxu0 %v134
    %v222 = vpop.f32.mrf.mxu0
    %v223 = vadd.f32 %v71, %v222
    %v224 = vpop.f32.mrf.mxu0
    %v225 = vadd.f32 %v75, %v224
    %v226 = vpop.f32.mrf.mxu0
    %v227 = vadd.f32 %v71, %v226
    %v228 = vpop.f32.mrf.mxu0
    %v229 = vadd.f32 %v75, %v228
    %230 = vmatprep.mubr.bf16.mxu0 0
    %231 = vmatmul.mubr.bf16.gmra.mxu0 %v137
    %v232 = vpop.f32.mrf.mxu0
    %v233 = vadd.f32 %v71, %v232
    %v234 = vpop.f32.mrf.mxu0
    %v235 = vadd.f32 %v75, %v234
    %v236 = vpop.f32.mrf.mxu0
    %v237 = vadd.f32 %v71, %v236
    %v238 = vpop.f32.mrf.mxu0
    %v239 = vadd.f32 %v75, %v238
    %240 = vmatprep.mubr.bf16.mxu0 0
    %241 = vmatmul.mubr.bf16.gmra.mxu0 %v140
    %v242 = vpop.f32.mrf.mxu0
    %v243 = vadd.f32 %v71, %v242
    %v244 = vpop.f32.mrf.mxu0
    %v245 = vadd.f32 %v75, %v244
    %v246 = vpop.f32.mrf.mxu0
    %v247 = vadd.f32 %v71, %v246
    %v248 = vpop.f32.mrf.mxu0
    %v249 = vadd.f32 %v75, %v248
    %250 = vmatprep.mubr.bf16.mxu0 0
    %251 = vmatmul.mubr.bf16.gmra.mxu0 %v143
    %v252 = vpop.f32.mrf.mxu0
    %v253 = vadd.f32 %v71, %v252
    %v254 = vpop.f32.mrf.mxu0
    %v255 = vadd.f32 %v75, %v254
    %v256 = vpop.f32.mrf.mxu0
    %v257 = vadd.f32 %v71, %v256
    %v258 = vpop.f32.mrf.mxu0
    %v259 = vadd.f32 %v75, %v258
    %260 = vmatprep.mubr.bf16.mxu0 0
    %261 = vmatmul.mubr.bf16.gmra.mxu0 %v146
    %v262 = vpop.f32.mrf.mxu0
    %v263 = vadd.f32 %v71, %v262
    %v264 = vpop.f32.mrf.mxu0
    %v265 = vadd.f32 %v75, %v264
    %v266 = vpop.f32.mrf.mxu0
    %v267 = vadd.f32 %v71, %v266
    %v268 = vpop.f32.mrf.mxu0
    %v269 = vadd.f32 %v75, %v268
    %270 = vdwg.mxu0
    %271 = vmatprep.subr.bf16.mxu0 0
    %272 = vmatpush1.bf16.msra.mxu0 0
    %273 = vmatprep.subr.bf16.mxu0 0
    %274 = vmatpush1.bf16.msra.mxu0 0
    %275 = vmatprep.subr.bf16.mxu0 0
    %276 = vmatpush1.bf16.msra.mxu0 0
    %277 = vmatprep.subr.bf16.mxu0 0
    %278 = vmatpush1.bf16.msra.mxu0 0
    %279 = vmatprep.subr.bf16.mxu0 0
    %280 = vmatpush1.bf16.msra.mxu0 0
    %281 = vmatprep.subr.bf16.mxu0 0
    %282 = vmatpush1.bf16.msra.mxu0 %v156
    %283 = vmatprep.subr.bf16.mxu0 0
    %284 = vmatpush1.bf16.msra.mxu0 %v113
    %285 = vmatprep.subr.bf16.mxu0 0
    %286 = vmatpush1.bf16.msra.mxu0 %v110
    %287 = vmatprep.subr.bf16.mxu0 0
    %288 = vmatpush2.bf16.msra.mxu0 0
    %289 = vmatprep.subr.bf16.mxu0 0
    %290 = vmatpush2.bf16.msra.mxu0 0
    %291 = vmatprep.subr.bf16.mxu0 0
    %292 = vmatpush2.bf16.msra.mxu0 0
    %293 = vmatprep.subr.bf16.mxu0 0
    %294 = vmatpush2.bf16.msra.mxu0 0
    %295 = vmatprep.subr.bf16.mxu0 0
    %296 = vmatpush2.bf16.msra.mxu0 0
    %297 = vmatprep.subr.bf16.mxu0 0
    %298 = vmatpush2.bf16.msra.mxu0 0
    %299 = vmatprep.subr.bf16.mxu0 0
    %300 = vmatpush2.bf16.msra.mxu0 0
    %301 = vmatprep.subr.bf16.mxu0 0
    %302 = vmatpush2.bf16.msra.mxu0 0
    %303 = vmatprep.mubr.bf16.mxu0 0
    %304 = vmatmul.mubr.bf16.gmra.mxu0 %v125
    %v305 = vpop.f32.mrf.mxu0
    %v306 = vadd.f32 %v79, %v305
    %v307 = vpop.f32.mrf.mxu0
    %v308 = vpop.f32.mrf.mxu0
    %v309 = vadd.f32 %v79, %v308
    %v310 = vpop.f32.mrf.mxu0
    %311 = vmatprep.mubr.bf16.mxu0 0
    %312 = vmatmul.mubr.bf16.gmra.mxu0 %v128
    %v313 = vpop.f32.mrf.mxu0
    %v314 = vadd.f32 %v79, %v313
    %v315 = vpop.f32.mrf.mxu0
    %v316 = vpop.f32.mrf.mxu0
    %v317 = vadd.f32 %v79, %v316
    %v318 = vpop.f32.mrf.mxu0
    %319 = vmatprep.mubr.bf16.mxu0 0
    %320 = vmatmul.mubr.bf16.gmra.mxu0 %v131
    %v321 = vpop.f32.mrf.mxu0
    %v322 = vadd.f32 %v79, %v321
    %v323 = vpop.f32.mrf.mxu0
    %v324 = vpop.f32.mrf.mxu0
    %v325 = vadd.f32 %v79, %v324
    %v326 = vpop.f32.mrf.mxu0
    %327 = vmatprep.mubr.bf16.mxu0 0
    %328 = vmatmul.mubr.bf16.gmra.mxu0 %v134
    %v329 = vpop.f32.mrf.mxu0
    %v330 = vadd.f32 %v79, %v329
    %v331 = vpop.f32.mrf.mxu0
    %v332 = vpop.f32.mrf.mxu0
    %v333 = vadd.f32 %v79, %v332
    %v334 = vpop.f32.mrf.mxu0
    %335 = vmatprep.mubr.bf16.mxu0 0
    %336 = vmatmul.mubr.bf16.gmra.mxu0 %v137
    %v337 = vpop.f32.mrf.mxu0
    %v338 = vadd.f32 %v79, %v337
    %v339 = vpop.f32.mrf.mxu0
    %v340 = vpop.f32.mrf.mxu0
    %v341 = vadd.f32 %v79, %v340
    %v342 = vpop.f32.mrf.mxu0
    %343 = vmatprep.mubr.bf16.mxu0 0
    %344 = vmatmul.mubr.bf16.gmra.mxu0 %v140
    %v345 = vpop.f32.mrf.mxu0
    %v346 = vadd.f32 %v79, %v345
    %v347 = vpop.f32.mrf.mxu0
    %v348 = vpop.f32.mrf.mxu0
    %v349 = vadd.f32 %v79, %v348
    %v350 = vpop.f32.mrf.mxu0
    %351 = vmatprep.mubr.bf16.mxu0 0
    %352 = vmatmul.mubr.bf16.gmra.mxu0 %v143
    %v353 = vpop.f32.mrf.mxu0
    %v354 = vadd.f32 %v79, %v353
    %v355 = vpop.f32.mrf.mxu0
    %v356 = vpop.f32.mrf.mxu0
    %v357 = vadd.f32 %v79, %v356
    %v358 = vpop.f32.mrf.mxu0
    %359 = vmatprep.mubr.bf16.mxu0 0
    %360 = vmatmul.mubr.bf16.gmra.mxu0 %v146
    %v361 = vpop.f32.mrf.mxu0
    %v362 = vadd.f32 %v79, %v361
    %v363 = vpop.f32.mrf.mxu0
    %v364 = vpop.f32.mrf.mxu0
    %v365 = vadd.f32 %v79, %v364
    %v366 = vpop.f32.mrf.mxu0
    %367 = vdwg.mxu0
    %vm368 = vcmask 162816
    %v369 = vsel %vm368, %v306, -inf
    %v370 = vrot.slane %v369, 4
    %v371 = vmax.f32 %v369, %v370
    %v372 = vrot.slane %v371, 2
    %v373 = vmax.f32 %v371, %v372
    %v374 = vrot.slane %v373, 1
    %v375 = vmax.f32 %v373, %v374
    %v376 = vsel %vm368, %v309, -inf
    %v377 = vrot.slane %v376, 4
    %v378 = vmax.f32 %v376, %v377
    %v379 = vrot.slane %v378, 2
    %v380 = vmax.f32 %v378, %v379
    %v381 = vrot.slane %v380, 1
    %v382 = vmax.f32 %v380, %v381
    %v383 = vsel %vm368, %v314, -inf
    %v384 = vrot.slane %v383, 4
    %v385 = vmax.f32 %v383, %v384
    %v386 = vrot.slane %v385, 2
    %v387 = vmax.f32 %v385, %v386
    %v388 = vrot.slane %v387, 1
    %v389 = vmax.f32 %v387, %v388
    %v390 = vsel %vm368, %v317, -inf
    %v391 = vrot.slane %v390, 4
    %v392 = vmax.f32 %v390, %v391
    %v393 = vrot.slane %v392, 2
    %v394 = vmax.f32 %v392, %v393
    %v395 = vrot.slane %v394, 1
    %v396 = vmax.f32 %v394, %v395
    %v397 = vsel %vm368, %v322, -inf
    %v398 = vrot.slane %v397, 4
    %v399 = vmax.f32 %v397, %v398
    %v400 = vrot.slane %v399, 2
    %v401 = vmax.f32 %v399, %v400
    %v402 = vrot.slane %v401, 1
    %v403 = vmax.f32 %v401, %v402
    %v404 = vsel %vm368, %v325, -inf
    %v405 = vrot.slane %v404, 4
    %v406 = vmax.f32 %v404, %v405
    %v407 = vrot.slane %v406, 2
    %v408 = vmax.f32 %v406, %v407
    %v409 = vrot.slane %v408, 1
    %v410 = vmax.f32 %v408, %v409
    %v411 = vsel %vm368, %v330, -inf
    %v412 = vrot.slane %v411, 4
    %v413 = vmax.f32 %v411, %v412
    %v414 = vrot.slane %v413, 2
    %v415 = vmax.f32 %v413, %v414
    %v416 = vrot.slane %v415, 1
    %v417 = vmax.f32 %v415, %v416
    %v418 = vsel %vm368, %v333, -inf
    %v419 = vrot.slane %v418, 4
    %v420 = vmax.f32 %v418, %v419
    %v421 = vrot.slane %v420, 2
    %v422 = vmax.f32 %v420, %v421
    %v423 = vrot.slane %v422, 1
    %v424 = vmax.f32 %v422, %v423
    %v425 = vsel %vm368, %v338, -inf
    %v426 = vrot.slane %v425, 4
    %v427 = vmax.f32 %v425, %v426
    %v428 = vrot.slane %v427, 2
    %v429 = vmax.f32 %v427, %v428
    %v430 = vrot.slane %v429, 1
    %v431 = vmax.f32 %v429, %v430
    %v432 = vsel %vm368, %v341, -inf
    %v433 = vrot.slane %v432, 4
    %v434 = vmax.f32 %v432, %v433
    %v435 = vrot.slane %v434, 2
    %v436 = vmax.f32 %v434, %v435
    %v437 = vrot.slane %v436, 1
    %v438 = vmax.f32 %v436, %v437
    %v439 = vsel %vm368, %v346, -inf
    %v440 = vrot.slane %v439, 4
    %v441 = vmax.f32 %v439, %v440
    %v442 = vrot.slane %v441, 2
    %v443 = vmax.f32 %v441, %v442
    %v444 = vrot.slane %v443, 1
    %v445 = vmax.f32 %v443, %v444
    %v446 = vsel %vm368, %v349, -inf
    %v447 = vrot.slane %v446, 4
    %v448 = vmax.f32 %v446, %v447
    %v449 = vrot.slane %v448, 2
    %v450 = vmax.f32 %v448, %v449
    %v451 = vrot.slane %v450, 1
    %v452 = vmax.f32 %v450, %v451
    %v453 = vsel %vm368, %v354, -inf
    %v454 = vrot.slane %v453, 4
    %v455 = vmax.f32 %v453, %v454
    %v456 = vrot.slane %v455, 2
    %v457 = vmax.f32 %v455, %v456
    %v458 = vrot.slane %v457, 1
    %v459 = vmax.f32 %v457, %v458
    %v460 = vsel %vm368, %v357, -inf
    %v461 = vrot.slane %v460, 4
    %v462 = vmax.f32 %v460, %v461
    %v463 = vrot.slane %v462, 2
    %v464 = vmax.f32 %v462, %v463
    %v465 = vrot.slane %v464, 1
    %v466 = vmax.f32 %v464, %v465
    %v467 = vsel %vm368, %v362, -inf
    %v468 = vrot.slane %v467, 4
    %v469 = vmax.f32 %v467, %v468
    %v470 = vrot.slane %v469, 2
    %v471 = vmax.f32 %v469, %v470
    %v472 = vrot.slane %v471, 1
    %v473 = vmax.f32 %v471, %v472
    %v474 = vsel %vm368, %v365, -inf
    %v475 = vrot.slane %v474, 4
    %v476 = vmax.f32 %v474, %v475
    %v477 = vrot.slane %v476, 2
    %v478 = vmax.f32 %v476, %v477
    %v479 = vrot.slane %v478, 1
    %v480 = vmax.f32 %v478, %v479
    %v481 = vsub.f32 %v306, %v375
    %v482 = vsub.f32 %v309, %v382
    %v483 = vsub.f32 %v314, %v389
    %v484 = vsub.f32 %v317, %v396
    %v485 = vsub.f32 %v322, %v403
    %v486 = vsub.f32 %v325, %v410
    %v487 = vsub.f32 %v330, %v417
    %v488 = vsub.f32 %v333, %v424
    %v489 = vsub.f32 %v338, %v431
    %v490 = vsub.f32 %v341, %v438
    %v491 = vsub.f32 %v346, %v445
    %v492 = vsub.f32 %v349, %v452
    %v493 = vsub.f32 %v354, %v459
    %v494 = vsub.f32 %v357, %v466
    %v495 = vsub.f32 %v362, %v473
    %v496 = vsub.f32 %v365, %v480
    %v497 = vmul.f32 %v481, 1.442695
    %v498 = vpow.pop %v497
    %v499 = vmul.f32 %v482, 1.442695
    %v500 = vpow.pop %v499
    %v501 = vmul.f32 %v483, 1.442695
    %v502 = vpow.pop %v501
    %v503 = vmul.f32 %v484, 1.442695
    %v504 = vpow.pop %v503
    %v505 = vmul.f32 %v485, 1.442695
    %v506 = vpow.pop %v505
    %v507 = vmul.f32 %v486, 1.442695
    %v508 = vpow.pop %v507
    %v509 = vmul.f32 %v487, 1.442695
    %v510 = vpow.pop %v509
    %v511 = vmul.f32 %v488, 1.442695
    %v512 = vpow.pop %v511
    %v513 = vmul.f32 %v489, 1.442695
    %v514 = vpow.pop %v513
    %v515 = vmul.f32 %v490, 1.442695
    %v516 = vpow.pop %v515
    %v517 = vmul.f32 %v491, 1.442695
    %v518 = vpow.pop %v517
    %v519 = vmul.f32 %v492, 1.442695
    %v520 = vpow.pop %v519
    %v521 = vmul.f32 %v493, 1.442695
    %v522 = vpow.pop %v521
    %v523 = vmul.f32 %v494, 1.442695
    %v524 = vpow.pop %v523
    %v525 = vmul.f32 %v495, 1.442695
    %v526 = vpow.pop %v525
    %v527 = vmul.f32 %v496, 1.442695
    %v528 = vpow.pop %v527
    %v529 = vsel %vm368, %v498, 0.0
    %v530 = vrot.slane %v529, 4
    %v531 = vadd.f32 %v529, %v530
    %v532 = vrot.slane %v531, 2
    %v533 = vadd.f32 %v531, %v532
    %v534 = vrot.slane %v533, 1
    %v535 = vadd.f32 %v533, %v534
    %v536 = vsel %vm368, %v500, 0.0
    %v537 = vrot.slane %v536, 4
    %v538 = vadd.f32 %v536, %v537
    %v539 = vrot.slane %v538, 2
    %v540 = vadd.f32 %v538, %v539
    %v541 = vrot.slane %v540, 1
    %v542 = vadd.f32 %v540, %v541
    %v543 = vsel %vm368, %v502, 0.0
    %v544 = vrot.slane %v543, 4
    %v545 = vadd.f32 %v543, %v544
    %v546 = vrot.slane %v545, 2
    %v547 = vadd.f32 %v545, %v546
    %v548 = vrot.slane %v547, 1
    %v549 = vadd.f32 %v547, %v548
    %v550 = vsel %vm368, %v504, 0.0
    %v551 = vrot.slane %v550, 4
    %v552 = vadd.f32 %v550, %v551
    %v553 = vrot.slane %v552, 2
    %v554 = vadd.f32 %v552, %v553
    %v555 = vrot.slane %v554, 1
    %v556 = vadd.f32 %v554, %v555
    %v557 = vsel %vm368, %v506, 0.0
    %v558 = vrot.slane %v557, 4
    %v559 = vadd.f32 %v557, %v558
    %v560 = vrot.slane %v559, 2
    %v561 = vadd.f32 %v559, %v560
    %v562 = vrot.slane %v561, 1
    %v563 = vadd.f32 %v561, %v562
    %v564 = vsel %vm368, %v508, 0.0
    %v565 = vrot.slane %v564, 4
    %v566 = vadd.f32 %v564, %v565
    %v567 = vrot.slane %v566, 2
    %v568 = vadd.f32 %v566, %v567
    %v569 = vrot.slane %v568, 1
    %v570 = vadd.f32 %v568, %v569
    %v571 = vsel %vm368, %v510, 0.0
    %v572 = vrot.slane %v571, 4
    %v573 = vadd.f32 %v571, %v572
    %v574 = vrot.slane %v573, 2
    %v575 = vadd.f32 %v573, %v574
    %v576 = vrot.slane %v575, 1
    %v577 = vadd.f32 %v575, %v576
    %v578 = vsel %vm368, %v512, 0.0
    %v579 = vrot.slane %v578, 4
    %v580 = vadd.f32 %v578, %v579
    %v581 = vrot.slane %v580, 2
    %v582 = vadd.f32 %v580, %v581
    %v583 = vrot.slane %v582, 1
    %v584 = vadd.f32 %v582, %v583
    %v585 = vsel %vm368, %v514, 0.0
    %v586 = vrot.slane %v585, 4
    %v587 = vadd.f32 %v585, %v586
    %v588 = vrot.slane %v587, 2
    %v589 = vadd.f32 %v587, %v588
    %v590 = vrot.slane %v589, 1
    %v591 = vadd.f32 %v589, %v590
    %v592 = vsel %vm368, %v516, 0.0
    %v593 = vrot.slane %v592, 4
    %v594 = vadd.f32 %v592, %v593
    %v595 = vrot.slane %v594, 2
    %v596 = vadd.f32 %v594, %v595
    %v597 = vrot.slane %v596, 1
    %v598 = vadd.f32 %v596, %v597
    %v599 = vsel %vm368, %v518, 0.0
    %v600 = vrot.slane %v599, 4
    %v601 = vadd.f32 %v599, %v600
    %v602 = vrot.slane %v601, 2
    %v603 = vadd.f32 %v601, %v602
    %v604 = vrot.slane %v603, 1
    %v605 = vadd.f32 %v603, %v604
    %v606 = vsel %vm368, %v520, 0.0
    %v607 = vrot.slane %v606, 4
    %v608 = vadd.f32 %v606, %v607
    %v609 = vrot.slane %v608, 2
    %v610 = vadd.f32 %v608, %v609
    %v611 = vrot.slane %v610, 1
    %v612 = vadd.f32 %v610, %v611
    %v613 = vsel %vm368, %v522, 0.0
    %v614 = vrot.slane %v613, 4
    %v615 = vadd.f32 %v613, %v614
    %v616 = vrot.slane %v615, 2
    %v617 = vadd.f32 %v615, %v616
    %v618 = vrot.slane %v617, 1
    %v619 = vadd.f32 %v617, %v618
    %v620 = vsel %vm368, %v524, 0.0
    %v621 = vrot.slane %v620, 4
    %v622 = vadd.f32 %v620, %v621
    %v623 = vrot.slane %v622, 2
    %v624 = vadd.f32 %v622, %v623
    %v625 = vrot.slane %v624, 1
    %v626 = vadd.f32 %v624, %v625
    %v627 = vsel %vm368, %v526, 0.0
    %v628 = vrot.slane %v627, 4
    %v629 = vadd.f32 %v627, %v628
    %v630 = vrot.slane %v629, 2
    %v631 = vadd.f32 %v629, %v630
    %v632 = vrot.slane %v631, 1
    %v633 = vadd.f32 %v631, %v632
    %v634 = vsel %vm368, %v528, 0.0
    %v635 = vrot.slane %v634, 4
    %v636 = vadd.f32 %v634, %v635
    %v637 = vrot.slane %v636, 2
    %v638 = vadd.f32 %v636, %v637
    %v639 = vrot.slane %v638, 1
    %v640 = vadd.f32 %v638, %v639
    %v641 = vrcp.pop %v535
    %v642 = vrcp.pop %v542
    %v643 = vrcp.pop %v549
    %v644 = vrcp.pop %v556
    %v645 = vrcp.pop %v563
    %v646 = vrcp.pop %v570
    %v647 = vrcp.pop %v577
    %v648 = vrcp.pop %v584
    %v649 = vrcp.pop %v591
    %v650 = vrcp.pop %v598
    %v651 = vrcp.pop %v605
    %v652 = vrcp.pop %v612
    %v653 = vrcp.pop %v619
    %v654 = vrcp.pop %v626
    %v655 = vrcp.pop %v633
    %v656 = vrcp.pop %v640
    %v657 = vmul.f32 %v498, %v641
    %v658 = vmul.f32 %v500, %v642
    %v659 = vmul.f32 %v502, %v643
    %v660 = vmul.f32 %v504, %v644
    %v661 = vmul.f32 %v506, %v645
    %v662 = vmul.f32 %v508, %v646
    %v663 = vmul.f32 %v510, %v647
    %v664 = vmul.f32 %v512, %v648
    %v665 = vmul.f32 %v514, %v649
    %v666 = vmul.f32 %v516, %v650
    %v667 = vmul.f32 %v518, %v651
    %v668 = vmul.f32 %v520, %v652
    %v669 = vmul.f32 %v522, %v653
    %v670 = vmul.f32 %v524, %v654
    %v671 = vmul.f32 %v526, %v655
    %v672 = vmul.f32 %v528, %v656
    %v673 = vpack.c.bf16 %v658, %v657
    %v674 = vpack.c.bf16 %v660, %v659
    %v675 = vpack.c.bf16 %v662, %v661
    %v676 = vpack.c.bf16 %v664, %v663
    %v677 = vpack.c.bf16 %v666, %v665
    %v678 = vpack.c.bf16 %v668, %v667
    %v679 = vpack.c.bf16 %v670, %v669
    %v680 = vpack.c.bf16 %v672, %v671
    %v681 = vld [vmem:[%s5] sm:$0xf]
    %v682 = vld [vmem:[%s5 + $0x4] sm:$0xf]
    %v683 = vld [vmem:[%s5 + $0x8] sm:$0x3]
    %v687 = vunpack.c.l.b16 %v681
    %v688 = vunpack.c.l.b16 %v682
    %v689 = vunpack.c.l.b16 %v683
    %v690 = vpack.c.b16 %v688, %v687
    %v691 = vpack.c.b16 %v689, %v689
    %v694 = vsel %vm368, %v673, 0
    %v697 = vsel %vm368, %v674, 0
    %v700 = vsel %vm368, %v675, 0
    %v703 = vsel %vm368, %v676, 0
    %v706 = vsel %vm368, %v677, 0
    %v709 = vsel %vm368, %v678, 0
    %v712 = vsel %vm368, %v679, 0
    %v715 = vsel %vm368, %v680, 0
    %vm717 = vcmask 1041408
    %v719 = vsel %vm717, %v691, 0
    %721 = vmatprep.subr.bf16.mxu0 0
    %722 = vmatpush1.bf16.msra.mxu0 0
    %723 = vmatprep.subr.bf16.mxu0 0
    %724 = vmatpush1.bf16.msra.mxu0 0
    %725 = vmatprep.subr.bf16.mxu0 0
    %726 = vmatpush1.bf16.msra.mxu0 0
    %727 = vmatprep.subr.bf16.mxu0 0
    %728 = vmatpush1.bf16.msra.mxu0 0
    %729 = vmatprep.subr.bf16.mxu0 0
    %730 = vmatpush1.bf16.msra.mxu0 0
    %731 = vmatprep.subr.bf16.mxu0 0
    %732 = vmatpush1.bf16.msra.mxu0 0
    %733 = vmatprep.subr.bf16.mxu0 0
    %734 = vmatpush1.bf16.msra.mxu0 %v719
    %735 = vmatprep.subr.bf16.mxu0 0
    %736 = vmatpush1.bf16.msra.mxu0 %v690
    %737 = vmatprep.subr.bf16.mxu0 0
    %738 = vmatpush2.bf16.msra.mxu0 0
    %739 = vmatprep.subr.bf16.mxu0 0
    %740 = vmatpush2.bf16.msra.mxu0 0
    %741 = vmatprep.subr.bf16.mxu0 0
    %742 = vmatpush2.bf16.msra.mxu0 0
    %743 = vmatprep.subr.bf16.mxu0 0
    %744 = vmatpush2.bf16.msra.mxu0 0
    %745 = vmatprep.subr.bf16.mxu0 0
    %746 = vmatpush2.bf16.msra.mxu0 0
    %747 = vmatprep.subr.bf16.mxu0 0
    %748 = vmatpush2.bf16.msra.mxu0 0
    %749 = vmatprep.subr.bf16.mxu0 0
    %750 = vmatpush2.bf16.msra.mxu0 0
    %751 = vmatprep.subr.bf16.mxu0 0
    %752 = vmatpush2.bf16.msra.mxu0 0
    %753 = vmatprep.mubr.bf16.mxu0 0
    %754 = vmatmul.mubr.bf16.gmra.mxu0 %v694
    %v755 = vpop.f32.mrf.mxu0
    %v756 = vadd.f32 0.0, %v755
    %v757 = vpop.f32.mrf.mxu0
    %v758 = vpop.f32.mrf.mxu0
    %v759 = vadd.f32 0.0, %v758
    %v760 = vpop.f32.mrf.mxu0
    %761 = vmatprep.mubr.bf16.mxu0 0
    %762 = vmatmul.mubr.bf16.gmra.mxu0 %v697
    %v763 = vpop.f32.mrf.mxu0
    %v764 = vadd.f32 0.0, %v763
    %v765 = vpop.f32.mrf.mxu0
    %v766 = vpop.f32.mrf.mxu0
    %v767 = vadd.f32 0.0, %v766
    %v768 = vpop.f32.mrf.mxu0
    %769 = vmatprep.mubr.bf16.mxu0 0
    %770 = vmatmul.mubr.bf16.gmra.mxu0 %v700
    %v771 = vpop.f32.mrf.mxu0
    %v772 = vadd.f32 0.0, %v771
    %v773 = vpop.f32.mrf.mxu0
    %v774 = vpop.f32.mrf.mxu0
    %v775 = vadd.f32 0.0, %v774
    %v776 = vpop.f32.mrf.mxu0
    %777 = vmatprep.mubr.bf16.mxu0 0
    %778 = vmatmul.mubr.bf16.gmra.mxu0 %v703
    %v779 = vpop.f32.mrf.mxu0
    %v780 = vadd.f32 0.0, %v779
    %v781 = vpop.f32.mrf.mxu0
    %v782 = vpop.f32.mrf.mxu0
    %v783 = vadd.f32 0.0, %v782
    %v784 = vpop.f32.mrf.mxu0
    %785 = vmatprep.mubr.bf16.mxu0 0
    %786 = vmatmul.mubr.bf16.gmra.mxu0 %v706
    %v787 = vpop.f32.mrf.mxu0
    %v788 = vadd.f32 0.0, %v787
    %v789 = vpop.f32.mrf.mxu0
    %v790 = vpop.f32.mrf.mxu0
    %v791 = vadd.f32 0.0, %v790
    %v792 = vpop.f32.mrf.mxu0
    %793 = vmatprep.mubr.bf16.mxu0 0
    %794 = vmatmul.mubr.bf16.gmra.mxu0 %v709
    %v795 = vpop.f32.mrf.mxu0
    %v796 = vadd.f32 0.0, %v795
    %v797 = vpop.f32.mrf.mxu0
    %v798 = vpop.f32.mrf.mxu0
    %v799 = vadd.f32 0.0, %v798
    %v800 = vpop.f32.mrf.mxu0
    %801 = vmatprep.mubr.bf16.mxu0 0
    %802 = vmatmul.mubr.bf16.gmra.mxu0 %v712
    %v803 = vpop.f32.mrf.mxu0
    %v804 = vadd.f32 0.0, %v803
    %v805 = vpop.f32.mrf.mxu0
    %v806 = vpop.f32.mrf.mxu0
    %v807 = vadd.f32 0.0, %v806
    %v808 = vpop.f32.mrf.mxu0
    %809 = vmatprep.mubr.bf16.mxu0 0
    %810 = vmatmul.mubr.bf16.gmra.mxu0 %v715
    %v811 = vpop.f32.mrf.mxu0
    %v812 = vadd.f32 0.0, %v811
    %v813 = vpop.f32.mrf.mxu0
    %v814 = vpop.f32.mrf.mxu0
    %v815 = vadd.f32 0.0, %v814
    %v816 = vpop.f32.mrf.mxu0
    %817 = vdwg.mxu0
    %v818 = vmul.f32 %v756, %v193
    %v819 = vmul.f32 %v759, %v197
    %v820 = vmul.f32 %v764, %v203
    %v821 = vmul.f32 %v767, %v207
    %v822 = vmul.f32 %v772, %v213
    %v823 = vmul.f32 %v775, %v217
    %v824 = vmul.f32 %v780, %v223
    %v825 = vmul.f32 %v783, %v227
    %v826 = vmul.f32 %v788, %v233
    %v827 = vmul.f32 %v791, %v237
    %v828 = vmul.f32 %v796, %v243
    %v829 = vmul.f32 %v799, %v247
    %v830 = vmul.f32 %v804, %v253
    %v831 = vmul.f32 %v807, %v257
    %v832 = vmul.f32 %v812, %v263
    %v833 = vmul.f32 %v815, %v267
    %v834 = vsel %vm123, %v818, 0.0
    %v835 = vrot.slane %v834, 4
    %v836 = vadd.f32 %v834, %v835
    %v837 = vrot.slane %v836, 2
    %v838 = vadd.f32 %v836, %v837
    %v839 = vrot.slane %v838, 1
    %v840 = vadd.f32 %v838, %v839
    %v841 = vsel %vm123, %v819, 0.0
    %v842 = vrot.slane %v841, 4
    %v843 = vadd.f32 %v841, %v842
    %v844 = vrot.slane %v843, 2
    %v845 = vadd.f32 %v843, %v844
    %v846 = vrot.slane %v845, 1
    %v847 = vadd.f32 %v845, %v846
    %v848 = vsel %vm123, %v820, 0.0
    %v849 = vrot.slane %v848, 4
    %v850 = vadd.f32 %v848, %v849
    %v851 = vrot.slane %v850, 2
    %v852 = vadd.f32 %v850, %v851
    %v853 = vrot.slane %v852, 1
    %v854 = vadd.f32 %v852, %v853
    %v855 = vsel %vm123, %v821, 0.0
    %v856 = vrot.slane %v855, 4
    %v857 = vadd.f32 %v855, %v856
    %v858 = vrot.slane %v857, 2
    %v859 = vadd.f32 %v857, %v858
    %v860 = vrot.slane %v859, 1
    %v861 = vadd.f32 %v859, %v860
    %v862 = vsel %vm123, %v822, 0.0
    %v863 = vrot.slane %v862, 4
    %v864 = vadd.f32 %v862, %v863
    %v865 = vrot.slane %v864, 2
    %v866 = vadd.f32 %v864, %v865
    %v867 = vrot.slane %v866, 1
    %v868 = vadd.f32 %v866, %v867
    %v869 = vsel %vm123, %v823, 0.0
    %v870 = vrot.slane %v869, 4
    %v871 = vadd.f32 %v869, %v870
    %v872 = vrot.slane %v871, 2
    %v873 = vadd.f32 %v871, %v872
    %v874 = vrot.slane %v873, 1
    %v875 = vadd.f32 %v873, %v874
    %v876 = vsel %vm123, %v824, 0.0
    %v877 = vrot.slane %v876, 4
    %v878 = vadd.f32 %v876, %v877
    %v879 = vrot.slane %v878, 2
    %v880 = vadd.f32 %v878, %v879
    %v881 = vrot.slane %v880, 1
    %v882 = vadd.f32 %v880, %v881
    %v883 = vsel %vm123, %v825, 0.0
    %v884 = vrot.slane %v883, 4
    %v885 = vadd.f32 %v883, %v884
    %v886 = vrot.slane %v885, 2
    %v887 = vadd.f32 %v885, %v886
    %v888 = vrot.slane %v887, 1
    %v889 = vadd.f32 %v887, %v888
    %v890 = vsel %vm123, %v826, 0.0
    %v891 = vrot.slane %v890, 4
    %v892 = vadd.f32 %v890, %v891
    %v893 = vrot.slane %v892, 2
    %v894 = vadd.f32 %v892, %v893
    %v895 = vrot.slane %v894, 1
    %v896 = vadd.f32 %v894, %v895
    %v897 = vsel %vm123, %v827, 0.0
    %v898 = vrot.slane %v897, 4
    %v899 = vadd.f32 %v897, %v898
    %v900 = vrot.slane %v899, 2
    %v901 = vadd.f32 %v899, %v900
    %v902 = vrot.slane %v901, 1
    %v903 = vadd.f32 %v901, %v902
    %v904 = vsel %vm123, %v828, 0.0
    %v905 = vrot.slane %v904, 4
    %v906 = vadd.f32 %v904, %v905
    %v907 = vrot.slane %v906, 2
    %v908 = vadd.f32 %v906, %v907
    %v909 = vrot.slane %v908, 1
    %v910 = vadd.f32 %v908, %v909
    %v911 = vsel %vm123, %v829, 0.0
    %v912 = vrot.slane %v911, 4
    %v913 = vadd.f32 %v911, %v912
    %v914 = vrot.slane %v913, 2
    %v915 = vadd.f32 %v913, %v914
    %v916 = vrot.slane %v915, 1
    %v917 = vadd.f32 %v915, %v916
    %v918 = vsel %vm123, %v830, 0.0
    %v919 = vrot.slane %v918, 4
    %v920 = vadd.f32 %v918, %v919
    %v921 = vrot.slane %v920, 2
    %v922 = vadd.f32 %v920, %v921
    %v923 = vrot.slane %v922, 1
    %v924 = vadd.f32 %v922, %v923
    %v925 = vsel %vm123, %v831, 0.0
    %v926 = vrot.slane %v925, 4
    %v927 = vadd.f32 %v925, %v926
    %v928 = vrot.slane %v927, 2
    %v929 = vadd.f32 %v927, %v928
    %v930 = vrot.slane %v929, 1
    %v931 = vadd.f32 %v929, %v930
    %v932 = vsel %vm123, %v832, 0.0
    %v933 = vrot.slane %v932, 4
    %v934 = vadd.f32 %v932, %v933
    %v935 = vrot.slane %v934, 2
    %v936 = vadd.f32 %v934, %v935
    %v937 = vrot.slane %v936, 1
    %v938 = vadd.f32 %v936, %v937
    %v939 = vsel %vm123, %v833, 0.0
    %v940 = vrot.slane %v939, 4
    %v941 = vadd.f32 %v939, %v940
    %v942 = vrot.slane %v941, 2
    %v943 = vadd.f32 %v941, %v942
    %v944 = vrot.slane %v943, 1
    %v945 = vadd.f32 %v943, %v944
    %v946 = vmul.f32 %v195, %v840
    %v947 = vmul.f32 %v199, %v847
    %v948 = vmul.f32 %v205, %v854
    %v949 = vmul.f32 %v209, %v861
    %v950 = vmul.f32 %v215, %v868
    %v951 = vmul.f32 %v219, %v875
    %v952 = vmul.f32 %v225, %v882
    %v953 = vmul.f32 %v229, %v889
    %v954 = vmul.f32 %v235, %v896
    %v955 = vmul.f32 %v239, %v903
    %v956 = vmul.f32 %v245, %v910
    %v957 = vmul.f32 %v249, %v917
    %v958 = vmul.f32 %v255, %v924
    %v959 = vmul.f32 %v259, %v931
    %v960 = vmul.f32 %v265, %v938
    %v961 = vmul.f32 %v269, %v945
    %v962 = vpack.c.bf16 %v947, %v946
    %v963 = vpack.c.bf16 %v949, %v948
    %v964 = vpack.c.bf16 %v951, %v950
    %v965 = vpack.c.bf16 %v953, %v952
    %v966 = vpack.c.bf16 %v955, %v954
    %v967 = vpack.c.bf16 %v957, %v956
    %v968 = vpack.c.bf16 %v959, %v958
    %v969 = vpack.c.bf16 %v961, %v960
    %v970 = vld [vmem:[%s3] sm:$0xf]
    %v971 = vld [vmem:[%s3 + $0x4] sm:$0xf]
    %v972 = vld [vmem:[%s3 + $0x8] sm:$0xf]
    %v973 = vld [vmem:[%s3 + $0xc] sm:$0xf]
    %v974 = vld [vmem:[%s3 + $0x10] sm:$0xf]
    %v975 = vlaneseq
    %v976 = vshrl.u32 %v975, 7
    %v977 = vsub.s32 0, %v976
    %v978 = vrot.slane %v31, %v977
    %v984 = vunpack.c.l.b16 %v970
    %v985 = vunpack.c.l.b16 %v971
    %v986 = vunpack.c.l.b16 %v972
    %v987 = vunpack.c.l.b16 %v973
    %v988 = vunpack.c.l.b16 %v974
    %v989 = vpack.c.b16 %v985, %v984
    %v990 = vpack.c.b16 %v987, %v986
    %v991 = vpack.c.b16 %v988, %v988
    %v995 = vsel %vm123, %v962, 0
    %v998 = vsel %vm123, %v963, 0
    %v1001 = vsel %vm123, %v964, 0
    %v1004 = vsel %vm123, %v965, 0
    %v1007 = vsel %vm123, %v966, 0
    %v1010 = vsel %vm123, %v967, 0
    %v1013 = vsel %vm123, %v968, 0
    %v1016 = vsel %vm123, %v969, 0
    %v1019 = vsel %vm148, %v991, 0
    %1021 = vmatprep.subr.bf16.mxu0 0
    %1022 = vmatpush1.bf16.msra.mxu0 0
    %1023 = vmatprep.subr.bf16.mxu0 0
    %1024 = vmatpush1.bf16.msra.mxu0 0
    %1025 = vmatprep.subr.bf16.mxu0 0
    %1026 = vmatpush1.bf16.msra.mxu0 0
    %1027 = vmatprep.subr.bf16.mxu0 0
    %1028 = vmatpush1.bf16.msra.mxu0 0
    %1029 = vmatprep.subr.bf16.mxu0 0
    %1030 = vmatpush1.bf16.msra.mxu0 0
    %1031 = vmatprep.subr.bf16.mxu0 0
    %1032 = vmatpush1.bf16.msra.mxu0 %v1019
    %1033 = vmatprep.subr.bf16.mxu0 0
    %1034 = vmatpush1.bf16.msra.mxu0 %v990
    %1035 = vmatprep.subr.bf16.mxu0 0
    %1036 = vmatpush1.bf16.msra.mxu0 %v989
    %1037 = vmatprep.subr.bf16.mxu0 0
    %1038 = vmatpush2.bf16.msra.mxu0 0
    %1039 = vmatprep.subr.bf16.mxu0 0
    %1040 = vmatpush2.bf16.msra.mxu0 0
    %1041 = vmatprep.subr.bf16.mxu0 0
    %1042 = vmatpush2.bf16.msra.mxu0 0
    %1043 = vmatprep.subr.bf16.mxu0 0
    %1044 = vmatpush2.bf16.msra.mxu0 0
    %1045 = vmatprep.subr.bf16.mxu0 0
    %1046 = vmatpush2.bf16.msra.mxu0 0
    %1047 = vmatprep.subr.bf16.mxu0 0
    %1048 = vmatpush2.bf16.msra.mxu0 0
    %1049 = vmatprep.subr.bf16.mxu0 0
    %1050 = vmatpush2.bf16.msra.mxu0 0
    %1051 = vmatprep.subr.bf16.mxu0 0
    %1052 = vmatpush2.bf16.msra.mxu0 0
    %1053 = vmatprep.mubr.bf16.mxu0 0
    %1054 = vmatmul.mubr.bf16.gmra.mxu0 %v995
    %v1055 = vpop.f32.mrf.mxu0
    %v1056 = vadd.f32 %v978, %v1055
    %v1057 = vpop.f32.mrf.mxu0
    %v1058 = vpop.f32.mrf.mxu0
    %v1059 = vadd.f32 %v978, %v1058
    %v1060 = vpop.f32.mrf.mxu0
    %1061 = vmatprep.mubr.bf16.mxu0 0
    %1062 = vmatmul.mubr.bf16.gmra.mxu0 %v998
    %v1063 = vpop.f32.mrf.mxu0
    %v1064 = vadd.f32 %v978, %v1063
    %v1065 = vpop.f32.mrf.mxu0
    %v1066 = vpop.f32.mrf.mxu0
    %v1067 = vadd.f32 %v978, %v1066
    %v1068 = vpop.f32.mrf.mxu0
    %1069 = vmatprep.mubr.bf16.mxu0 0
    %1070 = vmatmul.mubr.bf16.gmra.mxu0 %v1001
    %v1071 = vpop.f32.mrf.mxu0
    %v1072 = vadd.f32 %v978, %v1071
    %v1073 = vpop.f32.mrf.mxu0
    %v1074 = vpop.f32.mrf.mxu0
    %v1075 = vadd.f32 %v978, %v1074
    %v1076 = vpop.f32.mrf.mxu0
    %1077 = vmatprep.mubr.bf16.mxu0 0
    %1078 = vmatmul.mubr.bf16.gmra.mxu0 %v1004
    %v1079 = vpop.f32.mrf.mxu0
    %v1080 = vadd.f32 %v978, %v1079
    %v1081 = vpop.f32.mrf.mxu0
    %v1082 = vpop.f32.mrf.mxu0
    %v1083 = vadd.f32 %v978, %v1082
    %v1084 = vpop.f32.mrf.mxu0
    %1085 = vmatprep.mubr.bf16.mxu0 0
    %1086 = vmatmul.mubr.bf16.gmra.mxu0 %v1007
    %v1087 = vpop.f32.mrf.mxu0
    %v1088 = vadd.f32 %v978, %v1087
    %v1089 = vpop.f32.mrf.mxu0
    %v1090 = vpop.f32.mrf.mxu0
    %v1091 = vadd.f32 %v978, %v1090
    %v1092 = vpop.f32.mrf.mxu0
    %1093 = vmatprep.mubr.bf16.mxu0 0
    %1094 = vmatmul.mubr.bf16.gmra.mxu0 %v1010
    %v1095 = vpop.f32.mrf.mxu0
    %v1096 = vadd.f32 %v978, %v1095
    %v1097 = vpop.f32.mrf.mxu0
    %v1098 = vpop.f32.mrf.mxu0
    %v1099 = vadd.f32 %v978, %v1098
    %v1100 = vpop.f32.mrf.mxu0
    %1101 = vmatprep.mubr.bf16.mxu0 0
    %1102 = vmatmul.mubr.bf16.gmra.mxu0 %v1013
    %v1103 = vpop.f32.mrf.mxu0
    %v1104 = vadd.f32 %v978, %v1103
    %v1105 = vpop.f32.mrf.mxu0
    %v1106 = vpop.f32.mrf.mxu0
    %v1107 = vadd.f32 %v978, %v1106
    %v1108 = vpop.f32.mrf.mxu0
    %1109 = vmatprep.mubr.bf16.mxu0 0
    %1110 = vmatmul.mubr.bf16.gmra.mxu0 %v1016
    %v1111 = vpop.f32.mrf.mxu0
    %v1112 = vadd.f32 %v978, %v1111
    %v1113 = vpop.f32.mrf.mxu0
    %v1114 = vpop.f32.mrf.mxu0
    %v1115 = vadd.f32 %v978, %v1114
    %v1116 = vpop.f32.mrf.mxu0
    %1117 = vdwg.mxu0
    %v1118 = vsel %vm368, %v1056, -inf
    %v1119 = vrot.slane %v1118, 4
    %v1120 = vmax.f32 %v1118, %v1119
    %v1121 = vrot.slane %v1120, 2
    %v1122 = vmax.f32 %v1120, %v1121
    %v1123 = vrot.slane %v1122, 1
    %v1124 = vmax.f32 %v1122, %v1123
    %v1125 = vsel %vm368, %v1059, -inf
    %v1126 = vrot.slane %v1125, 4
    %v1127 = vmax.f32 %v1125, %v1126
    %v1128 = vrot.slane %v1127, 2
    %v1129 = vmax.f32 %v1127, %v1128
    %v1130 = vrot.slane %v1129, 1
    %v1131 = vmax.f32 %v1129, %v1130
    %v1132 = vsel %vm368, %v1064, -inf
    %v1133 = vrot.slane %v1132, 4
    %v1134 = vmax.f32 %v1132, %v1133
    %v1135 = vrot.slane %v1134, 2
    %v1136 = vmax.f32 %v1134, %v1135
    %v1137 = vrot.slane %v1136, 1
    %v1138 = vmax.f32 %v1136, %v1137
    %v1139 = vsel %vm368, %v1067, -inf
    %v1140 = vrot.slane %v1139, 4
    %v1141 = vmax.f32 %v1139, %v1140
    %v1142 = vrot.slane %v1141, 2
    %v1143 = vmax.f32 %v1141, %v1142
    %v1144 = vrot.slane %v1143, 1
    %v1145 = vmax.f32 %v1143, %v1144
    %v1146 = vsel %vm368, %v1072, -inf
    %v1147 = vrot.slane %v1146, 4
    %v1148 = vmax.f32 %v1146, %v1147
    %v1149 = vrot.slane %v1148, 2
    %v1150 = vmax.f32 %v1148, %v1149
    %v1151 = vrot.slane %v1150, 1
    %v1152 = vmax.f32 %v1150, %v1151
    %v1153 = vsel %vm368, %v1075, -inf
    %v1154 = vrot.slane %v1153, 4
    %v1155 = vmax.f32 %v1153, %v1154
    %v1156 = vrot.slane %v1155, 2
    %v1157 = vmax.f32 %v1155, %v1156
    %v1158 = vrot.slane %v1157, 1
    %v1159 = vmax.f32 %v1157, %v1158
    %v1160 = vsel %vm368, %v1080, -inf
    %v1161 = vrot.slane %v1160, 4
    %v1162 = vmax.f32 %v1160, %v1161
    %v1163 = vrot.slane %v1162, 2
    %v1164 = vmax.f32 %v1162, %v1163
    %v1165 = vrot.slane %v1164, 1
    %v1166 = vmax.f32 %v1164, %v1165
    %v1167 = vsel %vm368, %v1083, -inf
    %v1168 = vrot.slane %v1167, 4
    %v1169 = vmax.f32 %v1167, %v1168
    %v1170 = vrot.slane %v1169, 2
    %v1171 = vmax.f32 %v1169, %v1170
    %v1172 = vrot.slane %v1171, 1
    %v1173 = vmax.f32 %v1171, %v1172
    %v1174 = vsel %vm368, %v1088, -inf
    %v1175 = vrot.slane %v1174, 4
    %v1176 = vmax.f32 %v1174, %v1175
    %v1177 = vrot.slane %v1176, 2
    %v1178 = vmax.f32 %v1176, %v1177
    %v1179 = vrot.slane %v1178, 1
    %v1180 = vmax.f32 %v1178, %v1179
    %v1181 = vsel %vm368, %v1091, -inf
    %v1182 = vrot.slane %v1181, 4
    %v1183 = vmax.f32 %v1181, %v1182
    %v1184 = vrot.slane %v1183, 2
    %v1185 = vmax.f32 %v1183, %v1184
    %v1186 = vrot.slane %v1185, 1
    %v1187 = vmax.f32 %v1185, %v1186
    %v1188 = vsel %vm368, %v1096, -inf
    %v1189 = vrot.slane %v1188, 4
    %v1190 = vmax.f32 %v1188, %v1189
    %v1191 = vrot.slane %v1190, 2
    %v1192 = vmax.f32 %v1190, %v1191
    %v1193 = vrot.slane %v1192, 1
    %v1194 = vmax.f32 %v1192, %v1193
    %v1195 = vsel %vm368, %v1099, -inf
    %v1196 = vrot.slane %v1195, 4
    %v1197 = vmax.f32 %v1195, %v1196
    %v1198 = vrot.slane %v1197, 2
    %v1199 = vmax.f32 %v1197, %v1198
    %v1200 = vrot.slane %v1199, 1
    %v1201 = vmax.f32 %v1199, %v1200
    %v1202 = vsel %vm368, %v1104, -inf
    %v1203 = vrot.slane %v1202, 4
    %v1204 = vmax.f32 %v1202, %v1203
    %v1205 = vrot.slane %v1204, 2
    %v1206 = vmax.f32 %v1204, %v1205
    %v1207 = vrot.slane %v1206, 1
    %v1208 = vmax.f32 %v1206, %v1207
    %v1209 = vsel %vm368, %v1107, -inf
    %v1210 = vrot.slane %v1209, 4
    %v1211 = vmax.f32 %v1209, %v1210
    %v1212 = vrot.slane %v1211, 2
    %v1213 = vmax.f32 %v1211, %v1212
    %v1214 = vrot.slane %v1213, 1
    %v1215 = vmax.f32 %v1213, %v1214
    %v1216 = vsel %vm368, %v1112, -inf
    %v1217 = vrot.slane %v1216, 4
    %v1218 = vmax.f32 %v1216, %v1217
    %v1219 = vrot.slane %v1218, 2
    %v1220 = vmax.f32 %v1218, %v1219
    %v1221 = vrot.slane %v1220, 1
    %v1222 = vmax.f32 %v1220, %v1221
    %v1223 = vsel %vm368, %v1115, -inf
    %v1224 = vrot.slane %v1223, 4
    %v1225 = vmax.f32 %v1223, %v1224
    %v1226 = vrot.slane %v1225, 2
    %v1227 = vmax.f32 %v1225, %v1226
    %v1228 = vrot.slane %v1227, 1
    %v1229 = vmax.f32 %v1227, %v1228
    %v1230 = vsub.f32 %v1056, %v1124
    %v1231 = vsub.f32 %v1059, %v1131
    %v1232 = vsub.f32 %v1064, %v1138
    %v1233 = vsub.f32 %v1067, %v1145
    %v1234 = vsub.f32 %v1072, %v1152
    %v1235 = vsub.f32 %v1075, %v1159
    %v1236 = vsub.f32 %v1080, %v1166
    %v1237 = vsub.f32 %v1083, %v1173
    %v1238 = vsub.f32 %v1088, %v1180
    %v1239 = vsub.f32 %v1091, %v1187
    %v1240 = vsub.f32 %v1096, %v1194
    %v1241 = vsub.f32 %v1099, %v1201
    %v1242 = vsub.f32 %v1104, %v1208
    %v1243 = vsub.f32 %v1107, %v1215
    %v1244 = vsub.f32 %v1112, %v1222
    %v1245 = vsub.f32 %v1115, %v1229
    %v1246 = vmul.f32 %v1230, 1.442695
    %v1247 = vpow.pop %v1246
    %v1248 = vmul.f32 %v1231, 1.442695
    %v1249 = vpow.pop %v1248
    %v1250 = vmul.f32 %v1232, 1.442695
    %v1251 = vpow.pop %v1250
    %v1252 = vmul.f32 %v1233, 1.442695
    %v1253 = vpow.pop %v1252
    %v1254 = vmul.f32 %v1234, 1.442695
    %v1255 = vpow.pop %v1254
    %v1256 = vmul.f32 %v1235, 1.442695
    %v1257 = vpow.pop %v1256
    %v1258 = vmul.f32 %v1236, 1.442695
    %v1259 = vpow.pop %v1258
    %v1260 = vmul.f32 %v1237, 1.442695
    %v1261 = vpow.pop %v1260
    %v1262 = vmul.f32 %v1238, 1.442695
    %v1263 = vpow.pop %v1262
    %v1264 = vmul.f32 %v1239, 1.442695
    %v1265 = vpow.pop %v1264
    %v1266 = vmul.f32 %v1240, 1.442695
    %v1267 = vpow.pop %v1266
    %v1268 = vmul.f32 %v1241, 1.442695
    %v1269 = vpow.pop %v1268
    %v1270 = vmul.f32 %v1242, 1.442695
    %v1271 = vpow.pop %v1270
    %v1272 = vmul.f32 %v1243, 1.442695
    %v1273 = vpow.pop %v1272
    %v1274 = vmul.f32 %v1244, 1.442695
    %v1275 = vpow.pop %v1274
    %v1276 = vmul.f32 %v1245, 1.442695
    %v1277 = vpow.pop %v1276
    %v1278 = vsel %vm368, %v1247, 0.0
    %v1279 = vrot.slane %v1278, 4
    %v1280 = vadd.f32 %v1278, %v1279
    %v1281 = vrot.slane %v1280, 2
    %v1282 = vadd.f32 %v1280, %v1281
    %v1283 = vrot.slane %v1282, 1
    %v1284 = vadd.f32 %v1282, %v1283
    %v1285 = vsel %vm368, %v1249, 0.0
    %v1286 = vrot.slane %v1285, 4
    %v1287 = vadd.f32 %v1285, %v1286
    %v1288 = vrot.slane %v1287, 2
    %v1289 = vadd.f32 %v1287, %v1288
    %v1290 = vrot.slane %v1289, 1
    %v1291 = vadd.f32 %v1289, %v1290
    %v1292 = vsel %vm368, %v1251, 0.0
    %v1293 = vrot.slane %v1292, 4
    %v1294 = vadd.f32 %v1292, %v1293
    %v1295 = vrot.slane %v1294, 2
    %v1296 = vadd.f32 %v1294, %v1295
    %v1297 = vrot.slane %v1296, 1
    %v1298 = vadd.f32 %v1296, %v1297
    %v1299 = vsel %vm368, %v1253, 0.0
    %v1300 = vrot.slane %v1299, 4
    %v1301 = vadd.f32 %v1299, %v1300
    %v1302 = vrot.slane %v1301, 2
    %v1303 = vadd.f32 %v1301, %v1302
    %v1304 = vrot.slane %v1303, 1
    %v1305 = vadd.f32 %v1303, %v1304
    %v1306 = vsel %vm368, %v1255, 0.0
    %v1307 = vrot.slane %v1306, 4
    %v1308 = vadd.f32 %v1306, %v1307
    %v1309 = vrot.slane %v1308, 2
    %v1310 = vadd.f32 %v1308, %v1309
    %v1311 = vrot.slane %v1310, 1
    %v1312 = vadd.f32 %v1310, %v1311
    %v1313 = vsel %vm368, %v1257, 0.0
    %v1314 = vrot.slane %v1313, 4
    %v1315 = vadd.f32 %v1313, %v1314
    %v1316 = vrot.slane %v1315, 2
    %v1317 = vadd.f32 %v1315, %v1316
    %v1318 = vrot.slane %v1317, 1
    %v1319 = vadd.f32 %v1317, %v1318
    %v1320 = vsel %vm368, %v1259, 0.0
    %v1321 = vrot.slane %v1320, 4
    %v1322 = vadd.f32 %v1320, %v1321
    %v1323 = vrot.slane %v1322, 2
    %v1324 = vadd.f32 %v1322, %v1323
    %v1325 = vrot.slane %v1324, 1
    %v1326 = vadd.f32 %v1324, %v1325
    %v1327 = vsel %vm368, %v1261, 0.0
    %v1328 = vrot.slane %v1327, 4
    %v1329 = vadd.f32 %v1327, %v1328
    %v1330 = vrot.slane %v1329, 2
    %v1331 = vadd.f32 %v1329, %v1330
    %v1332 = vrot.slane %v1331, 1
    %v1333 = vadd.f32 %v1331, %v1332
    %v1334 = vsel %vm368, %v1263, 0.0
    %v1335 = vrot.slane %v1334, 4
    %v1336 = vadd.f32 %v1334, %v1335
    %v1337 = vrot.slane %v1336, 2
    %v1338 = vadd.f32 %v1336, %v1337
    %v1339 = vrot.slane %v1338, 1
    %v1340 = vadd.f32 %v1338, %v1339
    %v1341 = vsel %vm368, %v1265, 0.0
    %v1342 = vrot.slane %v1341, 4
    %v1343 = vadd.f32 %v1341, %v1342
    %v1344 = vrot.slane %v1343, 2
    %v1345 = vadd.f32 %v1343, %v1344
    %v1346 = vrot.slane %v1345, 1
    %v1347 = vadd.f32 %v1345, %v1346
    %v1348 = vsel %vm368, %v1267, 0.0
    %v1349 = vrot.slane %v1348, 4
    %v1350 = vadd.f32 %v1348, %v1349
    %v1351 = vrot.slane %v1350, 2
    %v1352 = vadd.f32 %v1350, %v1351
    %v1353 = vrot.slane %v1352, 1
    %v1354 = vadd.f32 %v1352, %v1353
    %v1355 = vsel %vm368, %v1269, 0.0
    %v1356 = vrot.slane %v1355, 4
    %v1357 = vadd.f32 %v1355, %v1356
    %v1358 = vrot.slane %v1357, 2
    %v1359 = vadd.f32 %v1357, %v1358
    %v1360 = vrot.slane %v1359, 1
    %v1361 = vadd.f32 %v1359, %v1360
    %v1362 = vsel %vm368, %v1271, 0.0
    %v1363 = vrot.slane %v1362, 4
    %v1364 = vadd.f32 %v1362, %v1363
    %v1365 = vrot.slane %v1364, 2
    %v1366 = vadd.f32 %v1364, %v1365
    %v1367 = vrot.slane %v1366, 1
    %v1368 = vadd.f32 %v1366, %v1367
    %v1369 = vsel %vm368, %v1273, 0.0
    %v1370 = vrot.slane %v1369, 4
    %v1371 = vadd.f32 %v1369, %v1370
    %v1372 = vrot.slane %v1371, 2
    %v1373 = vadd.f32 %v1371, %v1372
    %v1374 = vrot.slane %v1373, 1
    %v1375 = vadd.f32 %v1373, %v1374
    %v1376 = vsel %vm368, %v1275, 0.0
    %v1377 = vrot.slane %v1376, 4
    %v1378 = vadd.f32 %v1376, %v1377
    %v1379 = vrot.slane %v1378, 2
    %v1380 = vadd.f32 %v1378, %v1379
    %v1381 = vrot.slane %v1380, 1
    %v1382 = vadd.f32 %v1380, %v1381
    %v1383 = vsel %vm368, %v1277, 0.0
    %v1384 = vrot.slane %v1383, 4
    %v1385 = vadd.f32 %v1383, %v1384
    %v1386 = vrot.slane %v1385, 2
    %v1387 = vadd.f32 %v1385, %v1386
    %v1388 = vrot.slane %v1387, 1
    %v1389 = vadd.f32 %v1387, %v1388
    %v1390 = vrcp.pop %v1284
    %v1391 = vrcp.pop %v1291
    %v1392 = vrcp.pop %v1298
    %v1393 = vrcp.pop %v1305
    %v1394 = vrcp.pop %v1312
    %v1395 = vrcp.pop %v1319
    %v1396 = vrcp.pop %v1326
    %v1397 = vrcp.pop %v1333
    %v1398 = vrcp.pop %v1340
    %v1399 = vrcp.pop %v1347
    %v1400 = vrcp.pop %v1354
    %v1401 = vrcp.pop %v1361
    %v1402 = vrcp.pop %v1368
    %v1403 = vrcp.pop %v1375
    %v1404 = vrcp.pop %v1382
    %v1405 = vrcp.pop %v1389
    %v1406 = vmul.f32 %v1247, %v1390
    %v1407 = vmul.f32 %v1249, %v1391
    %v1408 = vmul.f32 %v1251, %v1392
    %v1409 = vmul.f32 %v1253, %v1393
    %v1410 = vmul.f32 %v1255, %v1394
    %v1411 = vmul.f32 %v1257, %v1395
    %v1412 = vmul.f32 %v1259, %v1396
    %v1413 = vmul.f32 %v1261, %v1397
    %v1414 = vmul.f32 %v1263, %v1398
    %v1415 = vmul.f32 %v1265, %v1399
    %v1416 = vmul.f32 %v1267, %v1400
    %v1417 = vmul.f32 %v1269, %v1401
    %v1418 = vmul.f32 %v1271, %v1402
    %v1419 = vmul.f32 %v1273, %v1403
    %v1420 = vmul.f32 %v1275, %v1404
    %v1421 = vmul.f32 %v1277, %v1405
    %v1422 = vpack.c.bf16 %v1407, %v1406
    %v1423 = vpack.c.bf16 %v1409, %v1408
    %v1424 = vpack.c.bf16 %v1411, %v1410
    %v1425 = vpack.c.bf16 %v1413, %v1412
    %v1426 = vpack.c.bf16 %v1415, %v1414
    %v1427 = vpack.c.bf16 %v1417, %v1416
    %v1428 = vpack.c.bf16 %v1419, %v1418
    %v1429 = vpack.c.bf16 %v1421, %v1420
    %v1431 = vsel %vm368, %v1422, 0
    %v1434 = vsel %vm368, %v1423, 0
    %v1437 = vsel %vm368, %v1424, 0
    %v1440 = vsel %vm368, %v1425, 0
    %v1443 = vsel %vm368, %v1426, 0
    %v1446 = vsel %vm368, %v1427, 0
    %v1449 = vsel %vm368, %v1428, 0
    %v1452 = vsel %vm368, %v1429, 0
    %1454 = vmatprep.subr.bf16.mxu0 0
    %1455 = vmatpush1.bf16.msra.mxu0 0
    %1456 = vmatprep.subr.bf16.mxu0 0
    %1457 = vmatpush1.bf16.msra.mxu0 0
    %1458 = vmatprep.subr.bf16.mxu0 0
    %1459 = vmatpush1.bf16.msra.mxu0 0
    %1460 = vmatprep.subr.bf16.mxu0 0
    %1461 = vmatpush1.bf16.msra.mxu0 0
    %1462 = vmatprep.subr.bf16.mxu0 0
    %1463 = vmatpush1.bf16.msra.mxu0 0
    %1464 = vmatprep.subr.bf16.mxu0 0
    %1465 = vmatpush1.bf16.msra.mxu0 0
    %1466 = vmatprep.subr.bf16.mxu0 0
    %1467 = vmatpush1.bf16.msra.mxu0 %v719
    %1468 = vmatprep.subr.bf16.mxu0 0
    %1469 = vmatpush1.bf16.msra.mxu0 %v690
    %1470 = vmatprep.subr.bf16.mxu0 0
    %1471 = vmatpush2.bf16.msra.mxu0 0
    %1472 = vmatprep.subr.bf16.mxu0 0
    %1473 = vmatpush2.bf16.msra.mxu0 0
    %1474 = vmatprep.subr.bf16.mxu0 0
    %1475 = vmatpush2.bf16.msra.mxu0 0
    %1476 = vmatprep.subr.bf16.mxu0 0
    %1477 = vmatpush2.bf16.msra.mxu0 0
    %1478 = vmatprep.subr.bf16.mxu0 0
    %1479 = vmatpush2.bf16.msra.mxu0 0
    %1480 = vmatprep.subr.bf16.mxu0 0
    %1481 = vmatpush2.bf16.msra.mxu0 0
    %1482 = vmatprep.subr.bf16.mxu0 0
    %1483 = vmatpush2.bf16.msra.mxu0 0
    %1484 = vmatprep.subr.bf16.mxu0 0
    %1485 = vmatpush2.bf16.msra.mxu0 0
    %1486 = vmatprep.mubr.bf16.mxu0 0
    %1487 = vmatmul.mubr.bf16.gmra.mxu0 %v1431
    %v1488 = vpop.f32.mrf.mxu0
    %v1489 = vadd.f32 0.0, %v1488
    %v1490 = vpop.f32.mrf.mxu0
    %v1491 = vpop.f32.mrf.mxu0
    %v1492 = vadd.f32 0.0, %v1491
    %v1493 = vpop.f32.mrf.mxu0
    %1494 = vmatprep.mubr.bf16.mxu0 0
    %1495 = vmatmul.mubr.bf16.gmra.mxu0 %v1434
    %v1496 = vpop.f32.mrf.mxu0
    %v1497 = vadd.f32 0.0, %v1496
    %v1498 = vpop.f32.mrf.mxu0
    %v1499 = vpop.f32.mrf.mxu0
    %v1500 = vadd.f32 0.0, %v1499
    %v1501 = vpop.f32.mrf.mxu0
    %1502 = vmatprep.mubr.bf16.mxu0 0
    %1503 = vmatmul.mubr.bf16.gmra.mxu0 %v1437
    %v1504 = vpop.f32.mrf.mxu0
    %v1505 = vadd.f32 0.0, %v1504
    %v1506 = vpop.f32.mrf.mxu0
    %v1507 = vpop.f32.mrf.mxu0
    %v1508 = vadd.f32 0.0, %v1507
    %v1509 = vpop.f32.mrf.mxu0
    %1510 = vmatprep.mubr.bf16.mxu0 0
    %1511 = vmatmul.mubr.bf16.gmra.mxu0 %v1440
    %v1512 = vpop.f32.mrf.mxu0
    %v1513 = vadd.f32 0.0, %v1512
    %v1514 = vpop.f32.mrf.mxu0
    %v1515 = vpop.f32.mrf.mxu0
    %v1516 = vadd.f32 0.0, %v1515
    %v1517 = vpop.f32.mrf.mxu0
    %1518 = vmatprep.mubr.bf16.mxu0 0
    %1519 = vmatmul.mubr.bf16.gmra.mxu0 %v1443
    %v1520 = vpop.f32.mrf.mxu0
    %v1521 = vadd.f32 0.0, %v1520
    %v1522 = vpop.f32.mrf.mxu0
    %v1523 = vpop.f32.mrf.mxu0
    %v1524 = vadd.f32 0.0, %v1523
    %v1525 = vpop.f32.mrf.mxu0
    %1526 = vmatprep.mubr.bf16.mxu0 0
    %1527 = vmatmul.mubr.bf16.gmra.mxu0 %v1446
    %v1528 = vpop.f32.mrf.mxu0
    %v1529 = vadd.f32 0.0, %v1528
    %v1530 = vpop.f32.mrf.mxu0
    %v1531 = vpop.f32.mrf.mxu0
    %v1532 = vadd.f32 0.0, %v1531
    %v1533 = vpop.f32.mrf.mxu0
    %1534 = vmatprep.mubr.bf16.mxu0 0
    %1535 = vmatmul.mubr.bf16.gmra.mxu0 %v1449
    %v1536 = vpop.f32.mrf.mxu0
    %v1537 = vadd.f32 0.0, %v1536
    %v1538 = vpop.f32.mrf.mxu0
    %v1539 = vpop.f32.mrf.mxu0
    %v1540 = vadd.f32 0.0, %v1539
    %v1541 = vpop.f32.mrf.mxu0
    %1542 = vmatprep.mubr.bf16.mxu0 0
    %1543 = vmatmul.mubr.bf16.gmra.mxu0 %v1452
    %v1544 = vpop.f32.mrf.mxu0
    %v1545 = vadd.f32 0.0, %v1544
    %v1546 = vpop.f32.mrf.mxu0
    %v1547 = vpop.f32.mrf.mxu0
    %v1548 = vadd.f32 0.0, %v1547
    %v1549 = vpop.f32.mrf.mxu0
    %1550 = vdwg.mxu0
    %v1551 = vmul.f32 %v1489, %v946
    %v1552 = vmul.f32 %v1492, %v947
    %v1553 = vmul.f32 %v1497, %v948
    %v1554 = vmul.f32 %v1500, %v949
    %v1555 = vmul.f32 %v1505, %v950
    %v1556 = vmul.f32 %v1508, %v951
    %v1557 = vmul.f32 %v1513, %v952
    %v1558 = vmul.f32 %v1516, %v953
    %v1559 = vmul.f32 %v1521, %v954
    %v1560 = vmul.f32 %v1524, %v955
    %v1561 = vmul.f32 %v1529, %v956
    %v1562 = vmul.f32 %v1532, %v957
    %v1563 = vmul.f32 %v1537, %v958
    %v1564 = vmul.f32 %v1540, %v959
    %v1565 = vmul.f32 %v1545, %v960
    %v1566 = vmul.f32 %v1548, %v961
    %v1567 = vsel %vm123, %v1551, 0.0
    %v1568 = vrot.slane %v1567, 4
    %v1569 = vadd.f32 %v1567, %v1568
    %v1570 = vrot.slane %v1569, 2
    %v1571 = vadd.f32 %v1569, %v1570
    %v1572 = vrot.slane %v1571, 1
    %v1573 = vadd.f32 %v1571, %v1572
    %v1574 = vsel %vm123, %v1552, 0.0
    %v1575 = vrot.slane %v1574, 4
    %v1576 = vadd.f32 %v1574, %v1575
    %v1577 = vrot.slane %v1576, 2
    %v1578 = vadd.f32 %v1576, %v1577
    %v1579 = vrot.slane %v1578, 1
    %v1580 = vadd.f32 %v1578, %v1579
    %v1581 = vsel %vm123, %v1553, 0.0
    %v1582 = vrot.slane %v1581, 4
    %v1583 = vadd.f32 %v1581, %v1582
    %v1584 = vrot.slane %v1583, 2
    %v1585 = vadd.f32 %v1583, %v1584
    %v1586 = vrot.slane %v1585, 1
    %v1587 = vadd.f32 %v1585, %v1586
    %v1588 = vsel %vm123, %v1554, 0.0
    %v1589 = vrot.slane %v1588, 4
    %v1590 = vadd.f32 %v1588, %v1589
    %v1591 = vrot.slane %v1590, 2
    %v1592 = vadd.f32 %v1590, %v1591
    %v1593 = vrot.slane %v1592, 1
    %v1594 = vadd.f32 %v1592, %v1593
    %v1595 = vsel %vm123, %v1555, 0.0
    %v1596 = vrot.slane %v1595, 4
    %v1597 = vadd.f32 %v1595, %v1596
    %v1598 = vrot.slane %v1597, 2
    %v1599 = vadd.f32 %v1597, %v1598
    %v1600 = vrot.slane %v1599, 1
    %v1601 = vadd.f32 %v1599, %v1600
    %v1602 = vsel %vm123, %v1556, 0.0
    %v1603 = vrot.slane %v1602, 4
    %v1604 = vadd.f32 %v1602, %v1603
    %v1605 = vrot.slane %v1604, 2
    %v1606 = vadd.f32 %v1604, %v1605
    %v1607 = vrot.slane %v1606, 1
    %v1608 = vadd.f32 %v1606, %v1607
    %v1609 = vsel %vm123, %v1557, 0.0
    %v1610 = vrot.slane %v1609, 4
    %v1611 = vadd.f32 %v1609, %v1610
    %v1612 = vrot.slane %v1611, 2
    %v1613 = vadd.f32 %v1611, %v1612
    %v1614 = vrot.slane %v1613, 1
    %v1615 = vadd.f32 %v1613, %v1614
    %v1616 = vsel %vm123, %v1558, 0.0
    %v1617 = vrot.slane %v1616, 4
    %v1618 = vadd.f32 %v1616, %v1617
    %v1619 = vrot.slane %v1618, 2
    %v1620 = vadd.f32 %v1618, %v1619
    %v1621 = vrot.slane %v1620, 1
    %v1622 = vadd.f32 %v1620, %v1621
    %v1623 = vsel %vm123, %v1559, 0.0
    %v1624 = vrot.slane %v1623, 4
    %v1625 = vadd.f32 %v1623, %v1624
    %v1626 = vrot.slane %v1625, 2
    %v1627 = vadd.f32 %v1625, %v1626
    %v1628 = vrot.slane %v1627, 1
    %v1629 = vadd.f32 %v1627, %v1628
    %v1630 = vsel %vm123, %v1560, 0.0
    %v1631 = vrot.slane %v1630, 4
    %v1632 = vadd.f32 %v1630, %v1631
    %v1633 = vrot.slane %v1632, 2
    %v1634 = vadd.f32 %v1632, %v1633
    %v1635 = vrot.slane %v1634, 1
    %v1636 = vadd.f32 %v1634, %v1635
    %v1637 = vsel %vm123, %v1561, 0.0
    %v1638 = vrot.slane %v1637, 4
    %v1639 = vadd.f32 %v1637, %v1638
    %v1640 = vrot.slane %v1639, 2
    %v1641 = vadd.f32 %v1639, %v1640
    %v1642 = vrot.slane %v1641, 1
    %v1643 = vadd.f32 %v1641, %v1642
    %v1644 = vsel %vm123, %v1562, 0.0
    %v1645 = vrot.slane %v1644, 4
    %v1646 = vadd.f32 %v1644, %v1645
    %v1647 = vrot.slane %v1646, 2
    %v1648 = vadd.f32 %v1646, %v1647
    %v1649 = vrot.slane %v1648, 1
    %v1650 = vadd.f32 %v1648, %v1649
    %v1651 = vsel %vm123, %v1563, 0.0
    %v1652 = vrot.slane %v1651, 4
    %v1653 = vadd.f32 %v1651, %v1652
    %v1654 = vrot.slane %v1653, 2
    %v1655 = vadd.f32 %v1653, %v1654
    %v1656 = vrot.slane %v1655, 1
    %v1657 = vadd.f32 %v1655, %v1656
    %v1658 = vsel %vm123, %v1564, 0.0
    %v1659 = vrot.slane %v1658, 4
    %v1660 = vadd.f32 %v1658, %v1659
    %v1661 = vrot.slane %v1660, 2
    %v1662 = vadd.f32 %v1660, %v1661
    %v1663 = vrot.slane %v1662, 1
    %v1664 = vadd.f32 %v1662, %v1663
    %v1665 = vsel %vm123, %v1565, 0.0
    %v1666 = vrot.slane %v1665, 4
    %v1667 = vadd.f32 %v1665, %v1666
    %v1668 = vrot.slane %v1667, 2
    %v1669 = vadd.f32 %v1667, %v1668
    %v1670 = vrot.slane %v1669, 1
    %v1671 = vadd.f32 %v1669, %v1670
    %v1672 = vsel %vm123, %v1566, 0.0
    %v1673 = vrot.slane %v1672, 4
    %v1674 = vadd.f32 %v1672, %v1673
    %v1675 = vrot.slane %v1674, 2
    %v1676 = vadd.f32 %v1674, %v1675
    %v1677 = vrot.slane %v1676, 1
    %v1678 = vadd.f32 %v1676, %v1677
    %v1679 = vmul.f32 %v1573, %v193
    %v1680 = vmul.f32 %v1580, %v197
    %v1681 = vmul.f32 %v1587, %v203
    %v1682 = vmul.f32 %v1594, %v207
    %v1683 = vmul.f32 %v1601, %v213
    %v1684 = vmul.f32 %v1608, %v217
    %v1685 = vmul.f32 %v1615, %v223
    %v1686 = vmul.f32 %v1622, %v227
    %v1687 = vmul.f32 %v1629, %v233
    %v1688 = vmul.f32 %v1636, %v237
    %v1689 = vmul.f32 %v1643, %v243
    %v1690 = vmul.f32 %v1650, %v247
    %v1691 = vmul.f32 %v1657, %v253
    %v1692 = vmul.f32 %v1664, %v257
    %v1693 = vmul.f32 %v1671, %v263
    %v1694 = vmul.f32 %v1678, %v267
    %v1695 = vpack.c.bf16 %v1680, %v1679
    %v1696 = vpack.c.bf16 %v1682, %v1681
    %v1697 = vpack.c.bf16 %v1684, %v1683
    %v1698 = vpack.c.bf16 %v1686, %v1685
    %v1699 = vpack.c.bf16 %v1688, %v1687
    %v1700 = vpack.c.bf16 %v1690, %v1689
    %v1701 = vpack.c.bf16 %v1692, %v1691
    %v1702 = vpack.c.bf16 %v1694, %v1693
    %v1703 = vld [vmem:[%s4] sm:$0xf]
    %v1704 = vld [vmem:[%s4 + $0x4] sm:$0xf]
    %v1705 = vld [vmem:[%s4 + $0x8] sm:$0xf]
    %v1706 = vld [vmem:[%s4 + $0xc] sm:$0xf]
    %v1707 = vld [vmem:[%s4 + $0x10] sm:$0xf]
    %v1708 = vlaneseq
    %v1709 = vshrl.u32 %v1708, 7
    %v1710 = vsub.s32 1, %v1709
    %v1711 = vrot.slane %v31, %v1710
    %v1717 = vunpack.c.l.b16 %v1703
    %v1718 = vunpack.c.l.b16 %v1704
    %v1719 = vunpack.c.l.b16 %v1705
    %v1720 = vunpack.c.l.b16 %v1706
    %v1721 = vunpack.c.l.b16 %v1707
    %v1722 = vpack.c.b16 %v1718, %v1717
    %v1723 = vpack.c.b16 %v1720, %v1719
    %v1724 = vpack.c.b16 %v1721, %v1721
    %v1728 = vsel %vm123, %v1695, 0
    %v1731 = vsel %vm123, %v1696, 0
    %v1734 = vsel %vm123, %v1697, 0
    %v1737 = vsel %vm123, %v1698, 0
    %v1740 = vsel %vm123, %v1699, 0
    %v1743 = vsel %vm123, %v1700, 0
    %v1746 = vsel %vm123, %v1701, 0
    %v1749 = vsel %vm123, %v1702, 0
    %v1752 = vsel %vm148, %v1724, 0
    %1754 = vmatprep.subr.bf16.mxu0 0
    %1755 = vmatpush1.bf16.msra.mxu0 0
    %1756 = vmatprep.subr.bf16.mxu0 0
    %1757 = vmatpush1.bf16.msra.mxu0 0
    %1758 = vmatprep.subr.bf16.mxu0 0
    %1759 = vmatpush1.bf16.msra.mxu0 0
    %1760 = vmatprep.subr.bf16.mxu0 0
    %1761 = vmatpush1.bf16.msra.mxu0 0
    %1762 = vmatprep.subr.bf16.mxu0 0
    %1763 = vmatpush1.bf16.msra.mxu0 0
    %1764 = vmatprep.subr.bf16.mxu0 0
    %1765 = vmatpush1.bf16.msra.mxu0 %v1752
    %1766 = vmatprep.subr.bf16.mxu0 0
    %1767 = vmatpush1.bf16.msra.mxu0 %v1723
    %1768 = vmatprep.subr.bf16.mxu0 0
    %1769 = vmatpush1.bf16.msra.mxu0 %v1722
    %1770 = vmatprep.subr.bf16.mxu0 0
    %1771 = vmatpush2.bf16.msra.mxu0 0
    %1772 = vmatprep.subr.bf16.mxu0 0
    %1773 = vmatpush2.bf16.msra.mxu0 0
    %1774 = vmatprep.subr.bf16.mxu0 0
    %1775 = vmatpush2.bf16.msra.mxu0 0
    %1776 = vmatprep.subr.bf16.mxu0 0
    %1777 = vmatpush2.bf16.msra.mxu0 0
    %1778 = vmatprep.subr.bf16.mxu0 0
    %1779 = vmatpush2.bf16.msra.mxu0 0
    %1780 = vmatprep.subr.bf16.mxu0 0
    %1781 = vmatpush2.bf16.msra.mxu0 0
    %1782 = vmatprep.subr.bf16.mxu0 0
    %1783 = vmatpush2.bf16.msra.mxu0 0
    %1784 = vmatprep.subr.bf16.mxu0 0
    %1785 = vmatpush2.bf16.msra.mxu0 0
    %1786 = vmatprep.mubr.bf16.mxu0 0
    %1787 = vmatmul.mubr.bf16.gmra.mxu0 %v1728
    %v1788 = vpop.f32.mrf.mxu0
    %v1789 = vadd.f32 %v1711, %v1788
    %v1790 = vpop.f32.mrf.mxu0
    %v1791 = vpop.f32.mrf.mxu0
    %v1792 = vadd.f32 %v1711, %v1791
    %v1793 = vpop.f32.mrf.mxu0
    %1794 = vmatprep.mubr.bf16.mxu0 0
    %1795 = vmatmul.mubr.bf16.gmra.mxu0 %v1731
    %v1796 = vpop.f32.mrf.mxu0
    %v1797 = vadd.f32 %v1711, %v1796
    %v1798 = vpop.f32.mrf.mxu0
    %v1799 = vpop.f32.mrf.mxu0
    %v1800 = vadd.f32 %v1711, %v1799
    %v1801 = vpop.f32.mrf.mxu0
    %1802 = vmatprep.mubr.bf16.mxu0 0
    %1803 = vmatmul.mubr.bf16.gmra.mxu0 %v1734
    %v1804 = vpop.f32.mrf.mxu0
    %v1805 = vadd.f32 %v1711, %v1804
    %v1806 = vpop.f32.mrf.mxu0
    %v1807 = vpop.f32.mrf.mxu0
    %v1808 = vadd.f32 %v1711, %v1807
    %v1809 = vpop.f32.mrf.mxu0
    %1810 = vmatprep.mubr.bf16.mxu0 0
    %1811 = vmatmul.mubr.bf16.gmra.mxu0 %v1737
    %v1812 = vpop.f32.mrf.mxu0
    %v1813 = vadd.f32 %v1711, %v1812
    %v1814 = vpop.f32.mrf.mxu0
    %v1815 = vpop.f32.mrf.mxu0
    %v1816 = vadd.f32 %v1711, %v1815
    %v1817 = vpop.f32.mrf.mxu0
    %1818 = vmatprep.mubr.bf16.mxu0 0
    %1819 = vmatmul.mubr.bf16.gmra.mxu0 %v1740
    %v1820 = vpop.f32.mrf.mxu0
    %v1821 = vadd.f32 %v1711, %v1820
    %v1822 = vpop.f32.mrf.mxu0
    %v1823 = vpop.f32.mrf.mxu0
    %v1824 = vadd.f32 %v1711, %v1823
    %v1825 = vpop.f32.mrf.mxu0
    %1826 = vmatprep.mubr.bf16.mxu0 0
    %1827 = vmatmul.mubr.bf16.gmra.mxu0 %v1743
    %v1828 = vpop.f32.mrf.mxu0
    %v1829 = vadd.f32 %v1711, %v1828
    %v1830 = vpop.f32.mrf.mxu0
    %v1831 = vpop.f32.mrf.mxu0
    %v1832 = vadd.f32 %v1711, %v1831
    %v1833 = vpop.f32.mrf.mxu0
    %1834 = vmatprep.mubr.bf16.mxu0 0
    %1835 = vmatmul.mubr.bf16.gmra.mxu0 %v1746
    %v1836 = vpop.f32.mrf.mxu0
    %v1837 = vadd.f32 %v1711, %v1836
    %v1838 = vpop.f32.mrf.mxu0
    %v1839 = vpop.f32.mrf.mxu0
    %v1840 = vadd.f32 %v1711, %v1839
    %v1841 = vpop.f32.mrf.mxu0
    %1842 = vmatprep.mubr.bf16.mxu0 0
    %1843 = vmatmul.mubr.bf16.gmra.mxu0 %v1749
    %v1844 = vpop.f32.mrf.mxu0
    %v1845 = vadd.f32 %v1711, %v1844
    %v1846 = vpop.f32.mrf.mxu0
    %v1847 = vpop.f32.mrf.mxu0
    %v1848 = vadd.f32 %v1711, %v1847
    %v1849 = vpop.f32.mrf.mxu0
    %1850 = vdwg.mxu0
    %v1851 = vadd.f32 %v1789, %v193
    %v1852 = vadd.f32 %v1792, %v197
    %v1853 = vadd.f32 %v1797, %v203
    %v1854 = vadd.f32 %v1800, %v207
    %v1855 = vadd.f32 %v1805, %v213
    %v1856 = vadd.f32 %v1808, %v217
    %v1857 = vadd.f32 %v1813, %v223
    %v1858 = vadd.f32 %v1816, %v227
    %v1859 = vadd.f32 %v1821, %v233
    %v1860 = vadd.f32 %v1824, %v237
    %v1861 = vadd.f32 %v1829, %v243
    %v1862 = vadd.f32 %v1832, %v247
    %v1863 = vadd.f32 %v1837, %v253
    %v1864 = vadd.f32 %v1840, %v257
    %v1865 = vadd.f32 %v1845, %v263
    %v1866 = vadd.f32 %v1848, %v267
    %v1867 = vpack.c.bf16 %v1852, %v1851
    %v1868 = vpack.c.bf16 %v1854, %v1853
    %v1869 = vpack.c.bf16 %v1856, %v1855
    %v1870 = vpack.c.bf16 %v1858, %v1857
    %v1871 = vpack.c.bf16 %v1860, %v1859
    %v1872 = vpack.c.bf16 %v1862, %v1861
    %v1873 = vpack.c.bf16 %v1864, %v1863
    %v1874 = vpack.c.bf16 %v1866, %v1865
    %v1875 = vld [vmem:[%s6] sm:$0xf]
    %v1876 = vld [vmem:[%s6 + $0x4] sm:$0xf]
    %v1877 = vld [vmem:[%s6 + $0x8] sm:$0xf]
    %v1878 = vld [vmem:[%s6 + $0xc] sm:$0xf]
    %v1879 = vld [vmem:[%s6 + $0x10] sm:$0xf]
    %v1880 = vlaneseq
    %v1881 = vshrl.u32 %v1880, 7
    %v1882 = vsub.s32 2, %v1881
    %v1883 = vrot.slane %v31, %v1882
    %v1889 = vunpack.c.l.b16 %v1875
    %v1890 = vunpack.c.l.b16 %v1876
    %v1891 = vunpack.c.l.b16 %v1877
    %v1892 = vunpack.c.l.b16 %v1878
    %v1893 = vunpack.c.l.b16 %v1879
    %v1894 = vpack.c.b16 %v1890, %v1889
    %v1895 = vpack.c.b16 %v1892, %v1891
    %v1896 = vpack.c.b16 %v1893, %v1893
    %v1900 = vsel %vm123, %v1867, 0
    %v1903 = vsel %vm123, %v1868, 0
    %v1906 = vsel %vm123, %v1869, 0
    %v1909 = vsel %vm123, %v1870, 0
    %v1912 = vsel %vm123, %v1871, 0
    %v1915 = vsel %vm123, %v1872, 0
    %v1918 = vsel %vm123, %v1873, 0
    %v1921 = vsel %vm123, %v1874, 0
    %v1924 = vsel %vm148, %v1896, 0
    %1926 = vmatprep.subr.bf16.mxu0 0
    %1927 = vmatpush1.bf16.msra.mxu0 0
    %1928 = vmatprep.subr.bf16.mxu0 0
    %1929 = vmatpush1.bf16.msra.mxu0 0
    %1930 = vmatprep.subr.bf16.mxu0 0
    %1931 = vmatpush1.bf16.msra.mxu0 0
    %1932 = vmatprep.subr.bf16.mxu0 0
    %1933 = vmatpush1.bf16.msra.mxu0 0
    %1934 = vmatprep.subr.bf16.mxu0 0
    %1935 = vmatpush1.bf16.msra.mxu0 0
    %1936 = vmatprep.subr.bf16.mxu0 0
    %1937 = vmatpush1.bf16.msra.mxu0 %v1924
    %1938 = vmatprep.subr.bf16.mxu0 0
    %1939 = vmatpush1.bf16.msra.mxu0 %v1895
    %1940 = vmatprep.subr.bf16.mxu0 0
    %1941 = vmatpush1.bf16.msra.mxu0 %v1894
    %1942 = vmatprep.subr.bf16.mxu0 0
    %1943 = vmatpush2.bf16.msra.mxu0 0
    %1944 = vmatprep.subr.bf16.mxu0 0
    %1945 = vmatpush2.bf16.msra.mxu0 0
    %1946 = vmatprep.subr.bf16.mxu0 0
    %1947 = vmatpush2.bf16.msra.mxu0 0
    %1948 = vmatprep.subr.bf16.mxu0 0
    %1949 = vmatpush2.bf16.msra.mxu0 0
    %1950 = vmatprep.subr.bf16.mxu0 0
    %1951 = vmatpush2.bf16.msra.mxu0 0
    %1952 = vmatprep.subr.bf16.mxu0 0
    %1953 = vmatpush2.bf16.msra.mxu0 0
    %1954 = vmatprep.subr.bf16.mxu0 0
    %1955 = vmatpush2.bf16.msra.mxu0 0
    %1956 = vmatprep.subr.bf16.mxu0 0
    %1957 = vmatpush2.bf16.msra.mxu0 0
    %1958 = vmatprep.mubr.bf16.mxu0 0
    %1959 = vmatmul.mubr.bf16.gmra.mxu0 %v1900
    %v1960 = vpop.f32.mrf.mxu0
    %v1961 = vadd.f32 %v1883, %v1960
    %v1962 = vpop.f32.mrf.mxu0
    %v1963 = vpop.f32.mrf.mxu0
    %v1964 = vadd.f32 %v1883, %v1963
    %v1965 = vpop.f32.mrf.mxu0
    %1966 = vmatprep.mubr.bf16.mxu0 0
    %1967 = vmatmul.mubr.bf16.gmra.mxu0 %v1903
    %v1968 = vpop.f32.mrf.mxu0
    %v1969 = vadd.f32 %v1883, %v1968
    %v1970 = vpop.f32.mrf.mxu0
    %v1971 = vpop.f32.mrf.mxu0
    %v1972 = vadd.f32 %v1883, %v1971
    %v1973 = vpop.f32.mrf.mxu0
    %1974 = vmatprep.mubr.bf16.mxu0 0
    %1975 = vmatmul.mubr.bf16.gmra.mxu0 %v1906
    %v1976 = vpop.f32.mrf.mxu0
    %v1977 = vadd.f32 %v1883, %v1976
    %v1978 = vpop.f32.mrf.mxu0
    %v1979 = vpop.f32.mrf.mxu0
    %v1980 = vadd.f32 %v1883, %v1979
    %v1981 = vpop.f32.mrf.mxu0
    %1982 = vmatprep.mubr.bf16.mxu0 0
    %1983 = vmatmul.mubr.bf16.gmra.mxu0 %v1909
    %v1984 = vpop.f32.mrf.mxu0
    %v1985 = vadd.f32 %v1883, %v1984
    %v1986 = vpop.f32.mrf.mxu0
    %v1987 = vpop.f32.mrf.mxu0
    %v1988 = vadd.f32 %v1883, %v1987
    %v1989 = vpop.f32.mrf.mxu0
    %1990 = vmatprep.mubr.bf16.mxu0 0
    %1991 = vmatmul.mubr.bf16.gmra.mxu0 %v1912
    %v1992 = vpop.f32.mrf.mxu0
    %v1993 = vadd.f32 %v1883, %v1992
    %v1994 = vpop.f32.mrf.mxu0
    %v1995 = vpop.f32.mrf.mxu0
    %v1996 = vadd.f32 %v1883, %v1995
    %v1997 = vpop.f32.mrf.mxu0
    %1998 = vmatprep.mubr.bf16.mxu0 0
    %1999 = vmatmul.mubr.bf16.gmra.mxu0 %v1915
    %v2000 = vpop.f32.mrf.mxu0
    %v2001 = vadd.f32 %v1883, %v2000
    %v2002 = vpop.f32.mrf.mxu0
    %v2003 = vpop.f32.mrf.mxu0
    %v2004 = vadd.f32 %v1883, %v2003
    %v2005 = vpop.f32.mrf.mxu0
    %2006 = vmatprep.mubr.bf16.mxu0 0
    %2007 = vmatmul.mubr.bf16.gmra.mxu0 %v1918
    %v2008 = vpop.f32.mrf.mxu0
    %v2009 = vadd.f32 %v1883, %v2008
    %v2010 = vpop.f32.mrf.mxu0
    %v2011 = vpop.f32.mrf.mxu0
    %v2012 = vadd.f32 %v1883, %v2011
    %v2013 = vpop.f32.mrf.mxu0
    %2014 = vmatprep.mubr.bf16.mxu0 0
    %2015 = vmatmul.mubr.bf16.gmra.mxu0 %v1921
    %v2016 = vpop.f32.mrf.mxu0
    %v2017 = vadd.f32 %v1883, %v2016
    %v2018 = vpop.f32.mrf.mxu0
    %v2019 = vpop.f32.mrf.mxu0
    %v2020 = vadd.f32 %v1883, %v2019
    %v2021 = vpop.f32.mrf.mxu0
    %2022 = vdwg.mxu0
    %v2023 = vtanh.pop %v1961
    %v2024 = vtanh.pop %v1964
    %v2025 = vtanh.pop %v1969
    %v2026 = vtanh.pop %v1972
    %v2027 = vtanh.pop %v1977
    %v2028 = vtanh.pop %v1980
    %v2029 = vtanh.pop %v1985
    %v2030 = vtanh.pop %v1988
    %v2031 = vtanh.pop %v1993
    %v2032 = vtanh.pop %v1996
    %v2033 = vtanh.pop %v2001
    %v2034 = vtanh.pop %v2004
    %v2035 = vtanh.pop %v2009
    %v2036 = vtanh.pop %v2012
    %v2037 = vtanh.pop %v2017
    %v2038 = vtanh.pop %v2020
    %v2039 = vlaneseq
    %v2040 = vshrl.u32 %v2039, 7
    %v2041 = vsub.s32 3, %v2040
    %v2042 = vrot.slane %v31, %v2041
    %v2043 = vmul.f32 %v2023, %v2042
    %v2044 = vmul.f32 %v2024, %v2042
    %v2045 = vmul.f32 %v2025, %v2042
    %v2046 = vmul.f32 %v2026, %v2042
    %v2047 = vmul.f32 %v2027, %v2042
    %v2048 = vmul.f32 %v2028, %v2042
    %v2049 = vmul.f32 %v2029, %v2042
    %v2050 = vmul.f32 %v2030, %v2042
    %v2051 = vmul.f32 %v2031, %v2042
    %v2052 = vmul.f32 %v2032, %v2042
    %v2053 = vmul.f32 %v2033, %v2042
    %v2054 = vmul.f32 %v2034, %v2042
    %v2055 = vmul.f32 %v2035, %v2042
    %v2056 = vmul.f32 %v2036, %v2042
    %v2057 = vmul.f32 %v2037, %v2042
    %v2058 = vmul.f32 %v2038, %v2042
    %vm2059 = vcmask 261120
    %v2060 = vsel %vm2059, %v2043, 0.0
    %2061 = vadd.xlane.f32.xlu0 %v2060
    %v2062 = vpop.xlane.xlu0 %2061
    %v2063 = vsel %vm2059, %v2044, 0.0
    %2064 = vadd.xlane.f32.xlu0 %v2063
    %v2065 = vpop.xlane.xlu0 %2064
    %v2066 = vsel %vm2059, %v2045, 0.0
    %2067 = vadd.xlane.f32.xlu0 %v2066
    %v2068 = vpop.xlane.xlu0 %2067
    %v2069 = vsel %vm2059, %v2046, 0.0
    %2070 = vadd.xlane.f32.xlu0 %v2069
    %v2071 = vpop.xlane.xlu0 %2070
    %v2072 = vsel %vm2059, %v2047, 0.0
    %2073 = vadd.xlane.f32.xlu0 %v2072
    %v2074 = vpop.xlane.xlu0 %2073
    %v2075 = vsel %vm2059, %v2048, 0.0
    %2076 = vadd.xlane.f32.xlu0 %v2075
    %v2077 = vpop.xlane.xlu0 %2076
    %v2078 = vsel %vm2059, %v2049, 0.0
    %2079 = vadd.xlane.f32.xlu0 %v2078
    %v2080 = vpop.xlane.xlu0 %2079
    %v2081 = vsel %vm2059, %v2050, 0.0
    %2082 = vadd.xlane.f32.xlu0 %v2081
    %v2083 = vpop.xlane.xlu0 %2082
    %v2084 = vsel %vm2059, %v2051, 0.0
    %2085 = vadd.xlane.f32.xlu0 %v2084
    %v2086 = vpop.xlane.xlu0 %2085
    %v2087 = vsel %vm2059, %v2052, 0.0
    %2088 = vadd.xlane.f32.xlu0 %v2087
    %v2089 = vpop.xlane.xlu0 %2088
    %v2090 = vsel %vm2059, %v2053, 0.0
    %2091 = vadd.xlane.f32.xlu0 %v2090
    %v2092 = vpop.xlane.xlu0 %2091
    %v2093 = vsel %vm2059, %v2054, 0.0
    %2094 = vadd.xlane.f32.xlu0 %v2093
    %v2095 = vpop.xlane.xlu0 %2094
    %v2096 = vsel %vm2059, %v2055, 0.0
    %2097 = vadd.xlane.f32.xlu0 %v2096
    %v2098 = vpop.xlane.xlu0 %2097
    %v2099 = vsel %vm2059, %v2056, 0.0
    %2100 = vadd.xlane.f32.xlu0 %v2099
    %v2101 = vpop.xlane.xlu0 %2100
    %v2102 = vsel %vm2059, %v2057, 0.0
    %2103 = vadd.xlane.f32.xlu0 %v2102
    %v2104 = vpop.xlane.xlu0 %2103
    %v2105 = vsel %vm2059, %v2058, 0.0
    %2106 = vadd.xlane.f32.xlu0 %v2105
    %v2107 = vpop.xlane.xlu0 %2106
    %v2108 = vlaneseq
    %v2109 = vshrl.u32 %v2108, 7
    %v2110 = vsub.s32 4, %v2109
    %v2111 = vrot.slane %v31, %v2110
    %v2112 = vadd.f32 %v2062, %v2111
    %v2113 = vadd.f32 %v2065, %v2111
    %v2114 = vadd.f32 %v2068, %v2111
    %v2115 = vadd.f32 %v2071, %v2111
    %v2116 = vadd.f32 %v2074, %v2111
    %v2117 = vadd.f32 %v2077, %v2111
    %v2118 = vadd.f32 %v2080, %v2111
    %v2119 = vadd.f32 %v2083, %v2111
    %v2120 = vadd.f32 %v2086, %v2111
    %v2121 = vadd.f32 %v2089, %v2111
    %v2122 = vadd.f32 %v2092, %v2111
    %v2123 = vadd.f32 %v2095, %v2111
    %v2124 = vadd.f32 %v2098, %v2111
    %v2125 = vadd.f32 %v2101, %v2111
    %v2126 = vadd.f32 %v2104, %v2111
    %v2127 = vadd.f32 %v2107, %v2111
    %vm2128 = vcmask 7168
    %v2129 = vsel %vm2128, %v2112, -inf
    %v2130 = vrot.slane %v2129, 4
    %v2131 = vmax.f32 %v2129, %v2130
    %v2132 = vrot.slane %v2131, 2
    %v2133 = vmax.f32 %v2131, %v2132
    %v2134 = vrot.slane %v2133, 1
    %v2135 = vmax.f32 %v2133, %v2134
    %v2136 = vsel %vm2128, %v2113, -inf
    %v2137 = vrot.slane %v2136, 4
    %v2138 = vmax.f32 %v2136, %v2137
    %v2139 = vrot.slane %v2138, 2
    %v2140 = vmax.f32 %v2138, %v2139
    %v2141 = vrot.slane %v2140, 1
    %v2142 = vmax.f32 %v2140, %v2141
    %v2143 = vsel %vm2128, %v2114, -inf
    %v2144 = vrot.slane %v2143, 4
    %v2145 = vmax.f32 %v2143, %v2144
    %v2146 = vrot.slane %v2145, 2
    %v2147 = vmax.f32 %v2145, %v2146
    %v2148 = vrot.slane %v2147, 1
    %v2149 = vmax.f32 %v2147, %v2148
    %v2150 = vsel %vm2128, %v2115, -inf
    %v2151 = vrot.slane %v2150, 4
    %v2152 = vmax.f32 %v2150, %v2151
    %v2153 = vrot.slane %v2152, 2
    %v2154 = vmax.f32 %v2152, %v2153
    %v2155 = vrot.slane %v2154, 1
    %v2156 = vmax.f32 %v2154, %v2155
    %v2157 = vsel %vm2128, %v2116, -inf
    %v2158 = vrot.slane %v2157, 4
    %v2159 = vmax.f32 %v2157, %v2158
    %v2160 = vrot.slane %v2159, 2
    %v2161 = vmax.f32 %v2159, %v2160
    %v2162 = vrot.slane %v2161, 1
    %v2163 = vmax.f32 %v2161, %v2162
    %v2164 = vsel %vm2128, %v2117, -inf
    %v2165 = vrot.slane %v2164, 4
    %v2166 = vmax.f32 %v2164, %v2165
    %v2167 = vrot.slane %v2166, 2
    %v2168 = vmax.f32 %v2166, %v2167
    %v2169 = vrot.slane %v2168, 1
    %v2170 = vmax.f32 %v2168, %v2169
    %v2171 = vsel %vm2128, %v2118, -inf
    %v2172 = vrot.slane %v2171, 4
    %v2173 = vmax.f32 %v2171, %v2172
    %v2174 = vrot.slane %v2173, 2
    %v2175 = vmax.f32 %v2173, %v2174
    %v2176 = vrot.slane %v2175, 1
    %v2177 = vmax.f32 %v2175, %v2176
    %v2178 = vsel %vm2128, %v2119, -inf
    %v2179 = vrot.slane %v2178, 4
    %v2180 = vmax.f32 %v2178, %v2179
    %v2181 = vrot.slane %v2180, 2
    %v2182 = vmax.f32 %v2180, %v2181
    %v2183 = vrot.slane %v2182, 1
    %v2184 = vmax.f32 %v2182, %v2183
    %v2185 = vsel %vm2128, %v2120, -inf
    %v2186 = vrot.slane %v2185, 4
    %v2187 = vmax.f32 %v2185, %v2186
    %v2188 = vrot.slane %v2187, 2
    %v2189 = vmax.f32 %v2187, %v2188
    %v2190 = vrot.slane %v2189, 1
    %v2191 = vmax.f32 %v2189, %v2190
    %v2192 = vsel %vm2128, %v2121, -inf
    %v2193 = vrot.slane %v2192, 4
    %v2194 = vmax.f32 %v2192, %v2193
    %v2195 = vrot.slane %v2194, 2
    %v2196 = vmax.f32 %v2194, %v2195
    %v2197 = vrot.slane %v2196, 1
    %v2198 = vmax.f32 %v2196, %v2197
    %v2199 = vsel %vm2128, %v2122, -inf
    %v2200 = vrot.slane %v2199, 4
    %v2201 = vmax.f32 %v2199, %v2200
    %v2202 = vrot.slane %v2201, 2
    %v2203 = vmax.f32 %v2201, %v2202
    %v2204 = vrot.slane %v2203, 1
    %v2205 = vmax.f32 %v2203, %v2204
    %v2206 = vsel %vm2128, %v2123, -inf
    %v2207 = vrot.slane %v2206, 4
    %v2208 = vmax.f32 %v2206, %v2207
    %v2209 = vrot.slane %v2208, 2
    %v2210 = vmax.f32 %v2208, %v2209
    %v2211 = vrot.slane %v2210, 1
    %v2212 = vmax.f32 %v2210, %v2211
    %v2213 = vsel %vm2128, %v2124, -inf
    %v2214 = vrot.slane %v2213, 4
    %v2215 = vmax.f32 %v2213, %v2214
    %v2216 = vrot.slane %v2215, 2
    %v2217 = vmax.f32 %v2215, %v2216
    %v2218 = vrot.slane %v2217, 1
    %v2219 = vmax.f32 %v2217, %v2218
    %v2220 = vsel %vm2128, %v2125, -inf
    %v2221 = vrot.slane %v2220, 4
    %v2222 = vmax.f32 %v2220, %v2221
    %v2223 = vrot.slane %v2222, 2
    %v2224 = vmax.f32 %v2222, %v2223
    %v2225 = vrot.slane %v2224, 1
    %v2226 = vmax.f32 %v2224, %v2225
    %v2227 = vsel %vm2128, %v2126, -inf
    %v2228 = vrot.slane %v2227, 4
    %v2229 = vmax.f32 %v2227, %v2228
    %v2230 = vrot.slane %v2229, 2
    %v2231 = vmax.f32 %v2229, %v2230
    %v2232 = vrot.slane %v2231, 1
    %v2233 = vmax.f32 %v2231, %v2232
    %v2234 = vsel %vm2128, %v2127, -inf
    %v2235 = vrot.slane %v2234, 4
    %v2236 = vmax.f32 %v2234, %v2235
    %v2237 = vrot.slane %v2236, 2
    %v2238 = vmax.f32 %v2236, %v2237
    %v2239 = vrot.slane %v2238, 1
    %v2240 = vmax.f32 %v2238, %v2239
    %v2241 = vsub.f32 %v2112, %v2135
    %v2242 = vsub.f32 %v2113, %v2142
    %v2243 = vsub.f32 %v2114, %v2149
    %v2244 = vsub.f32 %v2115, %v2156
    %v2245 = vsub.f32 %v2116, %v2163
    %v2246 = vsub.f32 %v2117, %v2170
    %v2247 = vsub.f32 %v2118, %v2177
    %v2248 = vsub.f32 %v2119, %v2184
    %v2249 = vsub.f32 %v2120, %v2191
    %v2250 = vsub.f32 %v2121, %v2198
    %v2251 = vsub.f32 %v2122, %v2205
    %v2252 = vsub.f32 %v2123, %v2212
    %v2253 = vsub.f32 %v2124, %v2219
    %v2254 = vsub.f32 %v2125, %v2226
    %v2255 = vsub.f32 %v2126, %v2233
    %v2256 = vsub.f32 %v2127, %v2240
    %v2257 = vmul.f32 %v2241, 1.442695
    %v2258 = vpow.pop %v2257
    %v2259 = vmul.f32 %v2242, 1.442695
    %v2260 = vpow.pop %v2259
    %v2261 = vmul.f32 %v2243, 1.442695
    %v2262 = vpow.pop %v2261
    %v2263 = vmul.f32 %v2244, 1.442695
    %v2264 = vpow.pop %v2263
    %v2265 = vmul.f32 %v2245, 1.442695
    %v2266 = vpow.pop %v2265
    %v2267 = vmul.f32 %v2246, 1.442695
    %v2268 = vpow.pop %v2267
    %v2269 = vmul.f32 %v2247, 1.442695
    %v2270 = vpow.pop %v2269
    %v2271 = vmul.f32 %v2248, 1.442695
    %v2272 = vpow.pop %v2271
    %v2273 = vmul.f32 %v2249, 1.442695
    %v2274 = vpow.pop %v2273
    %v2275 = vmul.f32 %v2250, 1.442695
    %v2276 = vpow.pop %v2275
    %v2277 = vmul.f32 %v2251, 1.442695
    %v2278 = vpow.pop %v2277
    %v2279 = vmul.f32 %v2252, 1.442695
    %v2280 = vpow.pop %v2279
    %v2281 = vmul.f32 %v2253, 1.442695
    %v2282 = vpow.pop %v2281
    %v2283 = vmul.f32 %v2254, 1.442695
    %v2284 = vpow.pop %v2283
    %v2285 = vmul.f32 %v2255, 1.442695
    %v2286 = vpow.pop %v2285
    %v2287 = vmul.f32 %v2256, 1.442695
    %v2288 = vpow.pop %v2287
    %v2289 = vsel %vm2128, %v2258, 0.0
    %v2290 = vrot.slane %v2289, 4
    %v2291 = vadd.f32 %v2289, %v2290
    %v2292 = vrot.slane %v2291, 2
    %v2293 = vadd.f32 %v2291, %v2292
    %v2294 = vrot.slane %v2293, 1
    %v2295 = vadd.f32 %v2293, %v2294
    %v2296 = vsel %vm2128, %v2260, 0.0
    %v2297 = vrot.slane %v2296, 4
    %v2298 = vadd.f32 %v2296, %v2297
    %v2299 = vrot.slane %v2298, 2
    %v2300 = vadd.f32 %v2298, %v2299
    %v2301 = vrot.slane %v2300, 1
    %v2302 = vadd.f32 %v2300, %v2301
    %v2303 = vsel %vm2128, %v2262, 0.0
    %v2304 = vrot.slane %v2303, 4
    %v2305 = vadd.f32 %v2303, %v2304
    %v2306 = vrot.slane %v2305, 2
    %v2307 = vadd.f32 %v2305, %v2306
    %v2308 = vrot.slane %v2307, 1
    %v2309 = vadd.f32 %v2307, %v2308
    %v2310 = vsel %vm2128, %v2264, 0.0
    %v2311 = vrot.slane %v2310, 4
    %v2312 = vadd.f32 %v2310, %v2311
    %v2313 = vrot.slane %v2312, 2
    %v2314 = vadd.f32 %v2312, %v2313
    %v2315 = vrot.slane %v2314, 1
    %v2316 = vadd.f32 %v2314, %v2315
    %v2317 = vsel %vm2128, %v2266, 0.0
    %v2318 = vrot.slane %v2317, 4
    %v2319 = vadd.f32 %v2317, %v2318
    %v2320 = vrot.slane %v2319, 2
    %v2321 = vadd.f32 %v2319, %v2320
    %v2322 = vrot.slane %v2321, 1
    %v2323 = vadd.f32 %v2321, %v2322
    %v2324 = vsel %vm2128, %v2268, 0.0
    %v2325 = vrot.slane %v2324, 4
    %v2326 = vadd.f32 %v2324, %v2325
    %v2327 = vrot.slane %v2326, 2
    %v2328 = vadd.f32 %v2326, %v2327
    %v2329 = vrot.slane %v2328, 1
    %v2330 = vadd.f32 %v2328, %v2329
    %v2331 = vsel %vm2128, %v2270, 0.0
    %v2332 = vrot.slane %v2331, 4
    %v2333 = vadd.f32 %v2331, %v2332
    %v2334 = vrot.slane %v2333, 2
    %v2335 = vadd.f32 %v2333, %v2334
    %v2336 = vrot.slane %v2335, 1
    %v2337 = vadd.f32 %v2335, %v2336
    %v2338 = vsel %vm2128, %v2272, 0.0
    %v2339 = vrot.slane %v2338, 4
    %v2340 = vadd.f32 %v2338, %v2339
    %v2341 = vrot.slane %v2340, 2
    %v2342 = vadd.f32 %v2340, %v2341
    %v2343 = vrot.slane %v2342, 1
    %v2344 = vadd.f32 %v2342, %v2343
    %v2345 = vsel %vm2128, %v2274, 0.0
    %v2346 = vrot.slane %v2345, 4
    %v2347 = vadd.f32 %v2345, %v2346
    %v2348 = vrot.slane %v2347, 2
    %v2349 = vadd.f32 %v2347, %v2348
    %v2350 = vrot.slane %v2349, 1
    %v2351 = vadd.f32 %v2349, %v2350
    %v2352 = vsel %vm2128, %v2276, 0.0
    %v2353 = vrot.slane %v2352, 4
    %v2354 = vadd.f32 %v2352, %v2353
    %v2355 = vrot.slane %v2354, 2
    %v2356 = vadd.f32 %v2354, %v2355
    %v2357 = vrot.slane %v2356, 1
    %v2358 = vadd.f32 %v2356, %v2357
    %v2359 = vsel %vm2128, %v2278, 0.0
    %v2360 = vrot.slane %v2359, 4
    %v2361 = vadd.f32 %v2359, %v2360
    %v2362 = vrot.slane %v2361, 2
    %v2363 = vadd.f32 %v2361, %v2362
    %v2364 = vrot.slane %v2363, 1
    %v2365 = vadd.f32 %v2363, %v2364
    %v2366 = vsel %vm2128, %v2280, 0.0
    %v2367 = vrot.slane %v2366, 4
    %v2368 = vadd.f32 %v2366, %v2367
    %v2369 = vrot.slane %v2368, 2
    %v2370 = vadd.f32 %v2368, %v2369
    %v2371 = vrot.slane %v2370, 1
    %v2372 = vadd.f32 %v2370, %v2371
    %v2373 = vsel %vm2128, %v2282, 0.0
    %v2374 = vrot.slane %v2373, 4
    %v2375 = vadd.f32 %v2373, %v2374
    %v2376 = vrot.slane %v2375, 2
    %v2377 = vadd.f32 %v2375, %v2376
    %v2378 = vrot.slane %v2377, 1
    %v2379 = vadd.f32 %v2377, %v2378
    %v2380 = vsel %vm2128, %v2284, 0.0
    %v2381 = vrot.slane %v2380, 4
    %v2382 = vadd.f32 %v2380, %v2381
    %v2383 = vrot.slane %v2382, 2
    %v2384 = vadd.f32 %v2382, %v2383
    %v2385 = vrot.slane %v2384, 1
    %v2386 = vadd.f32 %v2384, %v2385
    %v2387 = vsel %vm2128, %v2286, 0.0
    %v2388 = vrot.slane %v2387, 4
    %v2389 = vadd.f32 %v2387, %v2388
    %v2390 = vrot.slane %v2389, 2
    %v2391 = vadd.f32 %v2389, %v2390
    %v2392 = vrot.slane %v2391, 1
    %v2393 = vadd.f32 %v2391, %v2392
    %v2394 = vsel %vm2128, %v2288, 0.0
    %v2395 = vrot.slane %v2394, 4
    %v2396 = vadd.f32 %v2394, %v2395
    %v2397 = vrot.slane %v2396, 2
    %v2398 = vadd.f32 %v2396, %v2397
    %v2399 = vrot.slane %v2398, 1
    %v2400 = vadd.f32 %v2398, %v2399
    %v2401 = vadd.f32 %v2295, 1e-08
    %v2402 = vadd.f32 %v2302, 1e-08
    %v2403 = vadd.f32 %v2309, 1e-08
    %v2404 = vadd.f32 %v2316, 1e-08
    %v2405 = vadd.f32 %v2323, 1e-08
    %v2406 = vadd.f32 %v2330, 1e-08
    %v2407 = vadd.f32 %v2337, 1e-08
    %v2408 = vadd.f32 %v2344, 1e-08
    %v2409 = vadd.f32 %v2351, 1e-08
    %v2410 = vadd.f32 %v2358, 1e-08
    %v2411 = vadd.f32 %v2365, 1e-08
    %v2412 = vadd.f32 %v2372, 1e-08
    %v2413 = vadd.f32 %v2379, 1e-08
    %v2414 = vadd.f32 %v2386, 1e-08
    %v2415 = vadd.f32 %v2393, 1e-08
    %v2416 = vadd.f32 %v2400, 1e-08
    %v2417 = vrcp.pop %v2401
    %v2418 = vrcp.pop %v2402
    %v2419 = vrcp.pop %v2403
    %v2420 = vrcp.pop %v2404
    %v2421 = vrcp.pop %v2405
    %v2422 = vrcp.pop %v2406
    %v2423 = vrcp.pop %v2407
    %v2424 = vrcp.pop %v2408
    %v2425 = vrcp.pop %v2409
    %v2426 = vrcp.pop %v2410
    %v2427 = vrcp.pop %v2411
    %v2428 = vrcp.pop %v2412
    %v2429 = vrcp.pop %v2413
    %v2430 = vrcp.pop %v2414
    %v2431 = vrcp.pop %v2415
    %v2432 = vrcp.pop %v2416
    %v2433 = vmul.f32 %v2258, %v2417
    %v2434 = vmul.f32 %v2260, %v2418
    %v2435 = vmul.f32 %v2262, %v2419
    %v2436 = vmul.f32 %v2264, %v2420
    %v2437 = vmul.f32 %v2266, %v2421
    %v2438 = vmul.f32 %v2268, %v2422
    %v2439 = vmul.f32 %v2270, %v2423
    %v2440 = vmul.f32 %v2272, %v2424
    %v2441 = vmul.f32 %v2274, %v2425
    %v2442 = vmul.f32 %v2276, %v2426
    %v2443 = vmul.f32 %v2278, %v2427
    %v2444 = vmul.f32 %v2280, %v2428
    %v2445 = vmul.f32 %v2282, %v2429
    %v2446 = vmul.f32 %v2284, %v2430
    %v2447 = vmul.f32 %v2286, %v2431
    %v2448 = vmul.f32 %v2288, %v2432
    %2450 = vset.pattern.permute.xlu0 0
    %2451 = vperm.xlu0 %2450, %v2433
    %v2452 = vpop.permute.xlu0 %2451
    %2455 = vset.pattern.permute.xlu0 0
    %2456 = vperm.xlu0 %2455, %v2434
    %v2457 = vpop.permute.xlu0 %2456
    %2460 = vset.pattern.permute.xlu0 0
    %2461 = vperm.xlu0 %2460, %v2435
    %v2462 = vpop.permute.xlu0 %2461
    %2465 = vset.pattern.permute.xlu0 0
    %2466 = vperm.xlu0 %2465, %v2436
    %v2467 = vpop.permute.xlu0 %2466
    %2470 = vset.pattern.permute.xlu0 0
    %2471 = vperm.xlu0 %2470, %v2437
    %v2472 = vpop.permute.xlu0 %2471
    %2475 = vset.pattern.permute.xlu0 0
    %2476 = vperm.xlu0 %2475, %v2438
    %v2477 = vpop.permute.xlu0 %2476
    %2480 = vset.pattern.permute.xlu0 0
    %2481 = vperm.xlu0 %2480, %v2439
    %v2482 = vpop.permute.xlu0 %2481
    %2485 = vset.pattern.permute.xlu0 0
    %2486 = vperm.xlu0 %2485, %v2440
    %v2487 = vpop.permute.xlu0 %2486
    %2490 = vset.pattern.permute.xlu0 0
    %2491 = vperm.xlu0 %2490, %v2441
    %v2492 = vpop.permute.xlu0 %2491
    %2495 = vset.pattern.permute.xlu0 0
    %2496 = vperm.xlu0 %2495, %v2442
    %v2497 = vpop.permute.xlu0 %2496
    %2500 = vset.pattern.permute.xlu0 0
    %2501 = vperm.xlu0 %2500, %v2443
    %v2502 = vpop.permute.xlu0 %2501
    %2505 = vset.pattern.permute.xlu0 0
    %2506 = vperm.xlu0 %2505, %v2444
    %v2507 = vpop.permute.xlu0 %2506
    %2510 = vset.pattern.permute.xlu0 0
    %2511 = vperm.xlu0 %2510, %v2445
    %v2512 = vpop.permute.xlu0 %2511
    %2515 = vset.pattern.permute.xlu0 0
    %2516 = vperm.xlu0 %2515, %v2446
    %v2517 = vpop.permute.xlu0 %2516
    %2520 = vset.pattern.permute.xlu0 0
    %2521 = vperm.xlu0 %2520, %v2447
    %v2522 = vpop.permute.xlu0 %2521
    %2525 = vset.pattern.permute.xlu0 0
    %2526 = vperm.xlu0 %2525, %v2448
    %v2527 = vpop.permute.xlu0 %2526
    %v2529 = vmul.f32 %v2452, %v1851
    %v2530 = vmul.f32 %v2457, %v1852
    %v2531 = vmul.f32 %v2462, %v1853
    %v2532 = vmul.f32 %v2467, %v1854
    %v2533 = vmul.f32 %v2472, %v1855
    %v2534 = vmul.f32 %v2477, %v1856
    %v2535 = vmul.f32 %v2482, %v1857
    %v2536 = vmul.f32 %v2487, %v1858
    %v2537 = vmul.f32 %v2492, %v1859
    %v2538 = vmul.f32 %v2497, %v1860
    %v2539 = vmul.f32 %v2502, %v1861
    %v2540 = vmul.f32 %v2507, %v1862
    %v2541 = vmul.f32 %v2512, %v1863
    %v2542 = vmul.f32 %v2517, %v1864
    %v2543 = vmul.f32 %v2522, %v1865
    %v2544 = vmul.f32 %v2527, %v1866
    %v2545 = vsel %vm123, %v2529, 0.0
    %v2546 = vrot.slane %v2545, 4
    %v2547 = vadd.f32 %v2545, %v2546
    %v2548 = vrot.slane %v2547, 2
    %v2549 = vadd.f32 %v2547, %v2548
    %v2550 = vrot.slane %v2549, 1
    %v2551 = vadd.f32 %v2549, %v2550
    %v2552 = vsel %vm123, %v2530, 0.0
    %v2553 = vrot.slane %v2552, 4
    %v2554 = vadd.f32 %v2552, %v2553
    %v2555 = vrot.slane %v2554, 2
    %v2556 = vadd.f32 %v2554, %v2555
    %v2557 = vrot.slane %v2556, 1
    %v2558 = vadd.f32 %v2556, %v2557
    %v2559 = vsel %vm123, %v2531, 0.0
    %v2560 = vrot.slane %v2559, 4
    %v2561 = vadd.f32 %v2559, %v2560
    %v2562 = vrot.slane %v2561, 2
    %v2563 = vadd.f32 %v2561, %v2562
    %v2564 = vrot.slane %v2563, 1
    %v2565 = vadd.f32 %v2563, %v2564
    %v2566 = vsel %vm123, %v2532, 0.0
    %v2567 = vrot.slane %v2566, 4
    %v2568 = vadd.f32 %v2566, %v2567
    %v2569 = vrot.slane %v2568, 2
    %v2570 = vadd.f32 %v2568, %v2569
    %v2571 = vrot.slane %v2570, 1
    %v2572 = vadd.f32 %v2570, %v2571
    %v2573 = vsel %vm123, %v2533, 0.0
    %v2574 = vrot.slane %v2573, 4
    %v2575 = vadd.f32 %v2573, %v2574
    %v2576 = vrot.slane %v2575, 2
    %v2577 = vadd.f32 %v2575, %v2576
    %v2578 = vrot.slane %v2577, 1
    %v2579 = vadd.f32 %v2577, %v2578
    %v2580 = vsel %vm123, %v2534, 0.0
    %v2581 = vrot.slane %v2580, 4
    %v2582 = vadd.f32 %v2580, %v2581
    %v2583 = vrot.slane %v2582, 2
    %v2584 = vadd.f32 %v2582, %v2583
    %v2585 = vrot.slane %v2584, 1
    %v2586 = vadd.f32 %v2584, %v2585
    %v2587 = vsel %vm123, %v2535, 0.0
    %v2588 = vrot.slane %v2587, 4
    %v2589 = vadd.f32 %v2587, %v2588
    %v2590 = vrot.slane %v2589, 2
    %v2591 = vadd.f32 %v2589, %v2590
    %v2592 = vrot.slane %v2591, 1
    %v2593 = vadd.f32 %v2591, %v2592
    %v2594 = vsel %vm123, %v2536, 0.0
    %v2595 = vrot.slane %v2594, 4
    %v2596 = vadd.f32 %v2594, %v2595
    %v2597 = vrot.slane %v2596, 2
    %v2598 = vadd.f32 %v2596, %v2597
    %v2599 = vrot.slane %v2598, 1
    %v2600 = vadd.f32 %v2598, %v2599
    %v2601 = vsel %vm123, %v2537, 0.0
    %v2602 = vrot.slane %v2601, 4
    %v2603 = vadd.f32 %v2601, %v2602
    %v2604 = vrot.slane %v2603, 2
    %v2605 = vadd.f32 %v2603, %v2604
    %v2606 = vrot.slane %v2605, 1
    %v2607 = vadd.f32 %v2605, %v2606
    %v2608 = vsel %vm123, %v2538, 0.0
    %v2609 = vrot.slane %v2608, 4
    %v2610 = vadd.f32 %v2608, %v2609
    %v2611 = vrot.slane %v2610, 2
    %v2612 = vadd.f32 %v2610, %v2611
    %v2613 = vrot.slane %v2612, 1
    %v2614 = vadd.f32 %v2612, %v2613
    %v2615 = vsel %vm123, %v2539, 0.0
    %v2616 = vrot.slane %v2615, 4
    %v2617 = vadd.f32 %v2615, %v2616
    %v2618 = vrot.slane %v2617, 2
    %v2619 = vadd.f32 %v2617, %v2618
    %v2620 = vrot.slane %v2619, 1
    %v2621 = vadd.f32 %v2619, %v2620
    %v2622 = vsel %vm123, %v2540, 0.0
    %v2623 = vrot.slane %v2622, 4
    %v2624 = vadd.f32 %v2622, %v2623
    %v2625 = vrot.slane %v2624, 2
    %v2626 = vadd.f32 %v2624, %v2625
    %v2627 = vrot.slane %v2626, 1
    %v2628 = vadd.f32 %v2626, %v2627
    %v2629 = vsel %vm123, %v2541, 0.0
    %v2630 = vrot.slane %v2629, 4
    %v2631 = vadd.f32 %v2629, %v2630
    %v2632 = vrot.slane %v2631, 2
    %v2633 = vadd.f32 %v2631, %v2632
    %v2634 = vrot.slane %v2633, 1
    %v2635 = vadd.f32 %v2633, %v2634
    %v2636 = vsel %vm123, %v2542, 0.0
    %v2637 = vrot.slane %v2636, 4
    %v2638 = vadd.f32 %v2636, %v2637
    %v2639 = vrot.slane %v2638, 2
    %v2640 = vadd.f32 %v2638, %v2639
    %v2641 = vrot.slane %v2640, 1
    %v2642 = vadd.f32 %v2640, %v2641
    %v2643 = vsel %vm123, %v2543, 0.0
    %v2644 = vrot.slane %v2643, 4
    %v2645 = vadd.f32 %v2643, %v2644
    %v2646 = vrot.slane %v2645, 2
    %v2647 = vadd.f32 %v2645, %v2646
    %v2648 = vrot.slane %v2647, 1
    %v2649 = vadd.f32 %v2647, %v2648
    %v2650 = vsel %vm123, %v2544, 0.0
    %v2651 = vrot.slane %v2650, 4
    %v2652 = vadd.f32 %v2650, %v2651
    %v2653 = vrot.slane %v2652, 2
    %v2654 = vadd.f32 %v2652, %v2653
    %v2655 = vrot.slane %v2654, 1
    %v2656 = vadd.f32 %v2654, %v2655
    %vm2673 = vcmask 1041409
    %v2674 = vsel %vm2673, %v2558, %v2551
    %vm2675 = vcmask 1042434
    %v2676 = vsel %vm2675, %v2565, %v2674
    %vm2677 = vcmask 1043459
    %v2678 = vsel %vm2677, %v2572, %v2676
    %vm2679 = vcmask 1044484
    %v2680 = vsel %vm2679, %v2579, %v2678
    %vm2681 = vcmask 1045509
    %v2682 = vsel %vm2681, %v2586, %v2680
    %vm2683 = vcmask 1046534
    %v2684 = vsel %vm2683, %v2593, %v2682
    %vm2685 = vcmask 1047559
    %v2686 = vsel %vm2685, %v2600, %v2684
    %v2687 = vsel %vm2673, %v2614, %v2607
    %v2688 = vsel %vm2675, %v2621, %v2687
    %v2689 = vsel %vm2677, %v2628, %v2688
    %v2690 = vsel %vm2679, %v2635, %v2689
    %v2691 = vsel %vm2681, %v2642, %v2690
    %v2692 = vsel %vm2683, %v2649, %v2691
    %v2693 = vsel %vm2685, %v2656, %v2692
    %2696 = vst.msk [vmem:[#allocation2] sm:$0xff] %vm123, %v2686
    %2697 = vst.msk [vmem:[#allocation2 + $0x8] sm:$0xff] %vm123, %v2693
    // Predicated region
    $region34: #{tpu_custom_call.1} parent=1 // pred_check
      _
    $region35: #{tpu_custom_call.1} parent=1 // pred_check_branch
      %2699 = sbr.rel (0) target = $region37
    $region36: #{tpu_custom_call.1} parent=1 // pred_region
      %s2701 = ssub.s32 256, 256
      %2702 = vsyncadd [#allocation3], %s2701
      %s2703 = sshll.u32 [#allocation2], 4
      %s2704 = int_to_ptr.vmem [resolvable:$true] %s2703
      %2709 = dma.vmem_to_hbm [thread:$0]  %s2704, 256, %s8, [#allocation3], 128, 128, 8
    $region37: #{tpu_custom_call.1} parent=1 // pred_fallthru
      _
    // Predicated region
    $region38: #{tpu_custom_call.1} parent=1 // pred_check
      _
    $region39: #{tpu_custom_call.1} parent=1 // pred_check_branch
      %2711 = sbr.rel (0) target = $region41
    $region40: #{tpu_custom_call.1} parent=1 // pred_region
      %2712 = dma.done [#allocation3], 256
    $region41: #{tpu_custom_call.1} parent=1 // pred_fallthru
      _
    %2713 = vsyncpa [#allocation3], 1

</llo_original>
